<compile_context>
chip_gen: v6e
topology: v6e:2x2x1
jax: 0.10.0
libtpu: 0.0.40
codegen_flags: <defaults>
</compile_context>

<pallas_src>
import numpy as np

import jax
import jax.numpy as jnp
from jax import lax
from jax.experimental import pallas as pl
from jax.experimental.pallas import tpu as pltpu


# ------------------------------ Pallas kernel ---------------------------------

def _make_kernel(C, H, W, MID, FIN):
    HW = H * W
    FR = HW + 2 * W + 2                    # zero-framed flat image length
    HP = (H - 3) // 3 + 1                  # MaxPool2d(3, stride=3), floor mode
    WP = (W - 3) // 3 + 1
    RS = 3 * W                             # flat-index stride between pooled rows
    L_HM = HW - 2 * W                      # H-direction shift-max length
    L_WM = L_HM - 2                        # full shift-max ("wm") length
    L4 = RS * (HP - 1) + 3 * (WP - 1) + 1  # conv4 output frame length
    PADL = RS + 3                          # left zero pad of the conv4 frame
    PADR = max(0, (RS + 3) + L4 - L_WM)    # right zero pad (keeps slices in range)

    def kernel(in1_ref, in2_ref, m12_ref, m4_ref,
               w1d_ref, w1i_ref, w3_ref, w4_ref,
               bn1s_ref, bn1b_ref, bn2s_ref, bn2b_ref,
               fcw_ref, fcb_ref,
               out_ref):
        f32 = jnp.float32
        m_l = m12_ref[0:1, :]              # kills the w==0   wrap of dw==0 taps
        m_r = m12_ref[1:2, :]              # kills the w==W-1 wrap of dw==2 taps

        def slab(frame):
            """(cin, FR) zero-framed flat image -> (9*cin, HW) im2col slab."""
            taps = []
            for dh in range(3):
                for dw in range(3):
                    t = frame[:, dh * W + dw: dh * W + dw + HW]
                    if dw == 0:
                        t = t * m_l
                    elif dw == 2:
                        t = t * m_r
                    taps.append(t)
            return jnp.concatenate(taps, axis=0)

        # ---- stage 1: gate = sigmoid(conv3x3(cat([in2-in1, in2]) -> 1)) ------
        in2f = in2_ref[...]                                     # (C, FR)
        diff_slab = slab(in2f - in1_ref[...])                   # (9C, HW)
        g = jnp.dot(w1d_ref[...], diff_slab,
                    preferred_element_type=f32)                 # (1, HW)
        in2_slab = slab(in2f)                                   # (9C, HW), reused
        g = g + jnp.dot(w1i_ref[...], in2_slab,
                        preferred_element_type=f32)
        gate = jax.nn.sigmoid(g)                                # (1, HW)

        # ---- stage 2: conv3x3(gate * in2 -> MID) + folded BN1 + ReLU ---------
        # Reuse the in2 slab: tap(gate*in2) = shifted(gate) * tap(in2).  The
        # shifted gate is garbage at out-of-image tap positions, but the in2
        # slab is exactly zero there, so the products stay correct.
        zg = jnp.zeros((1, W + 1), f32)
        gate_fr = jnp.concatenate([zg, gate, zg], axis=1)       # (1, FR)
        gate_blk = jnp.concatenate(
            [jnp.broadcast_to(gate_fr[:, dh * W + dw: dh * W + dw + HW],
                              (C, HW))
             for dh in range(3) for dw in range(3)], axis=0)    # (9C, HW)
        f3 = jnp.dot(w3_ref[...], gate_blk * in2_slab,
                     preferred_element_type=f32)                # (MID, HW)
        f3 = jnp.maximum(f3 * bn1s_ref[...] + bn1b_ref[...], 0.0)

        # ---- MaxPool2d(3, stride=3): shift-max in the flat frame -------------
        hm = jnp.maximum(jnp.maximum(f3[:, :L_HM], f3[:, W:W + L_HM]),
                         f3[:, 2 * W:2 * W + L_HM])             # (MID, L_HM)
        wm = jnp.maximum(jnp.maximum(hm[:, :L_WM], hm[:, 1:1 + L_WM]),
                         hm[:, 2:2 + L_WM])                     # (MID, L_WM)
        # pooled(oh, ow) == wm[:, RS*oh + 3*ow]; other lanes hold finite garbage
        # that is masked away below.

        # ---- stage 3: conv3x3(MID -> FIN) on the strided pool frame ----------
        frame4 = jnp.concatenate(
            [jnp.zeros((MID, PADL), f32), wm, jnp.zeros((MID, PADR), f32)],
            axis=1)
        m4_dw0 = m4_ref[0:1, :]        # kills ow-1 < 0     taps
        m4_dw2 = m4_ref[1:2, :]        # kills ow+1 > WP-1  taps
        m4_avg = m4_ref[2:3, :]        # 1/(HP*WP) at the HP*WP valid lanes
        taps4 = []
        for dh in range(3):
            for dw in range(3):
                t = frame4[:, RS * dh + 3 * dw: RS * dh + 3 * dw + L4]
                if dw == 0:
                    t = t * m4_dw0
                elif dw == 2:
                    t = t * m4_dw2
                # dh out-of-range taps land in the zero pads -> already zero.
                taps4.append(t)
        slab4 = jnp.concatenate(taps4, axis=0)                  # (9*MID, L4)
        f4 = jnp.dot(w4_ref[...], slab4,
                     preferred_element_type=f32)                # (FIN, L4)
        f4 = jnp.maximum(f4 * bn2s_ref[...] + bn2b_ref[...], 0.0)

        # ---- AdaptiveAvgPool2d((1,1)) as one masked lane-sum -----------------
        avg = jnp.sum(f4 * m4_avg, axis=1, keepdims=True)       # (FIN, 1)

        # ---- classifier on the VPU + softmax(dim=1) --------------------------
        logits = jnp.sum(fcw_ref[...] * avg, axis=0,
                         keepdims=True) + fcb_ref[...]          # (1, 2)
        m = jnp.max(logits, axis=1, keepdims=True)
        e = jnp.exp(logits - m)
        out_ref[...] = e / jnp.sum(e, axis=1, keepdims=True)

    geom = dict(HW=HW, FR=FR, HP=HP, WP=WP, RS=RS, L4=L4)
    return kernel, geom


# --------------------------------- wrapper ------------------------------------

def teem_forward(in1, in2, p):
    """in1, in2: (B, C, H, W) float32 (NCHW, like the PyTorch module).
    Returns (B, 2) softmax probabilities."""
    B, C, H, W = in1.shape
    MID = p["w3"].shape[0]
    FIN = p["w4"].shape[0]
    kernel, g = _make_kernel(C, H, W, MID, FIN)
    HW, FR, HP, WP, RS, L4 = g["HW"], g["FR"], g["HP"], g["WP"], g["RS"], g["L4"]

    # Zero-framed, lane-flat inputs: [0]*(W+1) ++ flat(HxW) ++ [0]*(W+1).
    def to_frame(x):
        z = jnp.zeros((B, C, W + 1), x.dtype)
        return jnp.concatenate([z, x.reshape(B, C, HW), z], axis=-1)

    in1f = to_frame(in1)
    in2f = to_frame(in2)

    # Constant lane masks (host-side; avoids in-kernel integer div/mod).
    col = np.arange(HW) % W
    mask12 = np.stack([(col != 0), (col != W - 1)]).astype(np.float32)
    s = np.arange(L4)
    r = s % RS
    ow = r // 3
    mask4 = np.stack(
        [(ow >= 1).astype(np.float32),
         (ow <= WP - 2).astype(np.float32),
         ((r % 3 == 0) & (r <= 3 * (WP - 1))).astype(np.float32)
         / float(HP * WP)]).astype(np.float32)

    consts = (jnp.asarray(mask12), jnp.asarray(mask4),
              p["w1d"], p["w1i"], p["w3"], p["w4"],
              p["bn1_scale"], p["bn1_shift"], p["bn2_scale"], p["bn2_shift"],
              p["fc_w"], p["fc_b"])

    batch_spec = pl.BlockSpec((None, C, FR), lambda b: (b, 0, 0))

    def full_spec(a):
        nd = a.ndim
        return pl.BlockSpec(tuple(a.shape), lambda b, nd=nd: (0,) * nd)

    out = pl.pallas_call(
        kernel,
        out_shape=jax.ShapeDtypeStruct((B, 1, 2), jnp.float32),
        grid=(B,),
        in_specs=[batch_spec, batch_spec] + [full_spec(c) for c in consts],
        out_specs=pl.BlockSpec((None, 1, 2), lambda b: (b, 0, 0)),
        compiler_params=pltpu.CompilerParams(
            dimension_semantics=("parallel",)),   # v7x: 2 TCs split the batch
    )(in1f, in2f, *consts)
    return out.reshape(B, 2)


# ---------------------------- plain-JAX reference ------------------------------

def _conv_nchw(x, w_oihw):
    return lax.conv_general_dilated(
        x, w_oihw, window_strides=(1, 1), padding=((1, 1), (1, 1)),
        dimension_numbers=("NCHW", "OIHW", "NCHW"))


def reference_forward(in1, in2, p):
    x = jnp.concatenate([in2 - in1, in2], axis=1)
    x = jax.nn.sigmoid(_conv_nchw(x, p["w1_oihw"])) * in2
    x = _conv_nchw(x, p["w3_oihw"])
    x = jnp.maximum(x * p["bn1_scale"].reshape(1, -1, 1, 1)
                    + p["bn1_shift"].reshape(1, -1, 1, 1), 0.0)
    x = lax.reduce_window(x, -jnp.inf, lax.max,
                          (1, 1, 3, 3), (1, 1, 3, 3), "VALID")
    x = _conv_nchw(x, p["w4_oihw"])
    x = jnp.maximum(x * p["bn2_scale"].reshape(1, -1, 1, 1)
                    + p["bn2_shift"].reshape(1, -1, 1, 1), 0.0)
    x = jnp.mean(x, axis=(2, 3))
    logits = x @ p["fc_w"] + p["fc_b"]
    return jax.nn.softmax(logits, axis=-1)


# -------------------------------- param setup ----------------------------------

def _pack_conv(w_oihw):
    """OIHW 3x3 weight -> (Cout, 9*Cin), tap-major (kh,kw) then input channel."""
    co, ci = w_oihw.shape[:2]
    return jnp.transpose(w_oihw, (0, 2, 3, 1)).reshape(co, 9 * ci)


def make_params(key, chn, middle, final):
    eps = 1e-5
    ks = jax.random.split(key, 12)
    w1 = 0.3 * jax.random.normal(ks[0], (1, 2 * chn, 3, 3), jnp.float32)
    w3 = 0.3 * jax.random.normal(ks[1], (middle, chn, 3, 3), jnp.float32)
    w4 = 0.3 * jax.random.normal(ks[2], (final, middle, 3, 3), jnp.float32)

    g1 = 1.0 + 0.1 * jax.random.normal(ks[3], (middle,), jnp.float32)
    b1 = 0.1 * jax.random.normal(ks[4], (middle,), jnp.float32)
    m1 = 0.1 * jax.random.normal(ks[5], (middle,), jnp.float32)
    v1 = 0.5 + jnp.abs(jax.random.normal(ks[6], (middle,), jnp.float32))
    g2 = 1.0 + 0.1 * jax.random.normal(ks[7], (final,), jnp.float32)
    b2 = 0.1 * jax.random.normal(ks[8], (final,), jnp.float32)
    m2 = 0.1 * jax.random.normal(ks[9], (final,), jnp.float32)
    v2 = 0.5 + jnp.abs(jax.random.normal(ks[10], (final,), jnp.float32))

    bn1_scale = g1 / jnp.sqrt(v1 + eps)
    bn1_shift = b1 - m1 * bn1_scale
    bn2_scale = g2 / jnp.sqrt(v2 + eps)
    bn2_shift = b2 - m2 * bn2_scale

    kfc1, kfc2 = jax.random.split(ks[11])
    fc_w = jax.random.normal(kfc1, (final, 2), jnp.float32)   # = pytorch W.T
    fc_b = 0.1 * jax.random.normal(kfc2, (2,), jnp.float32)

    return {
        # kernel-side params (channels on sublanes, taps packed along K)
        "w1d": _pack_conv(w1[:, :chn]),      # (1, 9*chn)  diff half of conv1
        "w1i": _pack_conv(w1[:, chn:]),      # (1, 9*chn)  in2  half of conv1
        "w3": _pack_conv(w3),                # (middle, 9*chn)
        "w4": _pack_conv(w4),                # (final, 9*middle)
        "bn1_scale": bn1_scale.reshape(middle, 1),
        "bn1_shift": bn1_shift.reshape(middle, 1),
        "bn2_scale": bn2_scale.reshape(final, 1),
        "bn2_shift": bn2_shift.reshape(final, 1),
        "fc_w": fc_w,                        # (final, 2)
        "fc_b": fc_b.reshape(1, 2),
        # reference-side params (PyTorch-style OIHW)
        "w1_oihw": w1, "w3_oihw": w3, "w4_oihw": w4,
    }


if __name__ == "__main__":
    B, CHN, H, W = 2, 4, 16, 16
    MIDDLE, FINAL = 8, 4

    key = jax.random.PRNGKey(0)
    k1, k2, kp = jax.random.split(key, 3)
    # NCHW inputs, same shape as the PyTorch module: (2, 4, 16, 16)
    input_1 = jax.random.normal(k1, (B, CHN, H, W), jnp.float32)
    input_2 = jax.random.normal(k2, (B, CHN, H, W), jnp.float32)
    params = make_params(kp, CHN, MIDDLE, FINAL)

    out = jax.block_until_ready(teem_forward(input_1, input_2, params))
    ref = jax.block_until_ready(reference_forward(input_1, input_2, params))
    np.testing.assert_allclose(np.asarray(out), np.asarray(ref),
                               rtol=2e-3, atol=1e-4)
    print("KERNEL_OK")
</pallas_src>

<mosaic_0001>
module attributes {stable_mosaic.version = 11 : i64} {
  func.func @kernel(%arg0: i32, %arg1: memref<1x4x290xf32, #tpu.memory_space<vmem>>, %arg2: memref<1x4x290xf32, #tpu.memory_space<vmem>>, %arg3: memref<2x256xf32, #tpu.memory_space<vmem>>, %arg4: memref<3x205xf32, #tpu.memory_space<vmem>>, %arg5: memref<1x36xf32, #tpu.memory_space<vmem>>, %arg6: memref<1x36xf32, #tpu.memory_space<vmem>>, %arg7: memref<8x36xf32, #tpu.memory_space<vmem>>, %arg8: memref<4x72xf32, #tpu.memory_space<vmem>>, %arg9: memref<8x1xf32, #tpu.memory_space<vmem>>, %arg10: memref<8x1xf32, #tpu.memory_space<vmem>>, %arg11: memref<4x1xf32, #tpu.memory_space<vmem>>, %arg12: memref<4x1xf32, #tpu.memory_space<vmem>>, %arg13: memref<4x2xf32, #tpu.memory_space<vmem>>, %arg14: memref<1x2xf32, #tpu.memory_space<vmem>>, %arg15: memref<1x1x2xf32, #tpu.memory_space<vmem>>) attributes {dimension_semantics = [#tpu.dimension_semantics<parallel>], iteration_bounds = array<i64: 2>, scalar_prefetch = 0 : i64, scratch_operands = 0 : i64, tpu.core_type = #tpu.core_type<tc>, window_params = [{transform_indices = @transform_0, window_bounds = array<i64: 1, 4, 290>}, {transform_indices = @transform_1, window_bounds = array<i64: 1, 4, 290>}, {pipeline_mode = #tpu.pipeline_mode<synchronous>, transform_indices = @transform_2, window_bounds = array<i64: 2, 256>}, {pipeline_mode = #tpu.pipeline_mode<synchronous>, transform_indices = @transform_3, window_bounds = array<i64: 3, 205>}, {pipeline_mode = #tpu.pipeline_mode<synchronous>, transform_indices = @transform_4, window_bounds = array<i64: 1, 36>}, {pipeline_mode = #tpu.pipeline_mode<synchronous>, transform_indices = @transform_5, window_bounds = array<i64: 1, 36>}, {pipeline_mode = #tpu.pipeline_mode<synchronous>, transform_indices = @transform_6, window_bounds = array<i64: 8, 36>}, {pipeline_mode = #tpu.pipeline_mode<synchronous>, transform_indices = @transform_7, window_bounds = array<i64: 4, 72>}, {pipeline_mode = #tpu.pipeline_mode<synchronous>, transform_indices = @transform_8, window_bounds = array<i64: 8, 1>}, {pipeline_mode = #tpu.pipeline_mode<synchronous>, transform_indices = @transform_9, window_bounds = array<i64: 8, 1>}, {pipeline_mode = #tpu.pipeline_mode<synchronous>, transform_indices = @transform_10, window_bounds = array<i64: 4, 1>}, {pipeline_mode = #tpu.pipeline_mode<synchronous>, transform_indices = @transform_11, window_bounds = array<i64: 4, 1>}, {pipeline_mode = #tpu.pipeline_mode<synchronous>, transform_indices = @transform_12, window_bounds = array<i64: 4, 2>}, {pipeline_mode = #tpu.pipeline_mode<synchronous>, transform_indices = @transform_13, window_bounds = array<i64: 1, 2>}, {transform_indices = @transform_14, window_bounds = array<i64: 1, 1, 2>}]} {
    %c0 = arith.constant 0 : index
    %c0_0 = arith.constant 0 : index
    %0 = vector.load %arg3[%c0, %c0_0] : memref<2x256xf32, #tpu.memory_space<vmem>>, vector<1x256xf32>
    %c1 = arith.constant 1 : index
    %c0_1 = arith.constant 0 : index
    %1 = vector.load %arg3[%c1, %c0_1] : memref<2x256xf32, #tpu.memory_space<vmem>>, vector<1x256xf32>
    %c0_2 = arith.constant 0 : index
    %c0_3 = arith.constant 0 : index
    %c0_4 = arith.constant 0 : index
    %2 = vector.load %arg2[%c0_2, %c0_3, %c0_4] : memref<1x4x290xf32, #tpu.memory_space<vmem>>, vector<1x4x290xf32>
    %3 = vector.shape_cast %2 : vector<1x4x290xf32> to vector<4x290xf32>
    %c0_5 = arith.constant 0 : index
    %c0_6 = arith.constant 0 : index
    %c0_7 = arith.constant 0 : index
    %4 = vector.load %arg1[%c0_5, %c0_6, %c0_7] : memref<1x4x290xf32, #tpu.memory_space<vmem>>, vector<1x4x290xf32>
    %5 = vector.shape_cast %4 : vector<1x4x290xf32> to vector<4x290xf32>
    %6 = arith.subf %3, %5 : vector<4x290xf32>
    %7 = vector.extract_strided_slice %6 {offsets = [0, 0], sizes = [4, 256], strides = [1, 1]} : vector<4x290xf32> to vector<4x256xf32>
    %8 = vector.broadcast %0 : vector<1x256xf32> to vector<4x256xf32>
    %9 = arith.mulf %7, %8 : vector<4x256xf32>
    %10 = vector.extract_strided_slice %6 {offsets = [0, 1], sizes = [4, 256], strides = [1, 1]} : vector<4x290xf32> to vector<4x256xf32>
    %11 = vector.extract_strided_slice %6 {offsets = [0, 2], sizes = [4, 256], strides = [1, 1]} : vector<4x290xf32> to vector<4x256xf32>
    %12 = vector.broadcast %1 : vector<1x256xf32> to vector<4x256xf32>
    %13 = arith.mulf %11, %12 : vector<4x256xf32>
    %14 = vector.extract_strided_slice %6 {offsets = [0, 16], sizes = [4, 256], strides = [1, 1]} : vector<4x290xf32> to vector<4x256xf32>
    %15 = vector.broadcast %0 : vector<1x256xf32> to vector<4x256xf32>
    %16 = arith.mulf %14, %15 : vector<4x256xf32>
    %17 = vector.extract_strided_slice %6 {offsets = [0, 17], sizes = [4, 256], strides = [1, 1]} : vector<4x290xf32> to vector<4x256xf32>
    %18 = vector.extract_strided_slice %6 {offsets = [0, 18], sizes = [4, 256], strides = [1, 1]} : vector<4x290xf32> to vector<4x256xf32>
    %19 = vector.broadcast %1 : vector<1x256xf32> to vector<4x256xf32>
    %20 = arith.mulf %18, %19 : vector<4x256xf32>
    %21 = vector.extract_strided_slice %6 {offsets = [0, 32], sizes = [4, 256], strides = [1, 1]} : vector<4x290xf32> to vector<4x256xf32>
    %22 = vector.broadcast %0 : vector<1x256xf32> to vector<4x256xf32>
    %23 = arith.mulf %21, %22 : vector<4x256xf32>
    %24 = vector.extract_strided_slice %6 {offsets = [0, 33], sizes = [4, 256], strides = [1, 1]} : vector<4x290xf32> to vector<4x256xf32>
    %25 = vector.extract_strided_slice %6 {offsets = [0, 34], sizes = [4, 256], strides = [1, 1]} : vector<4x290xf32> to vector<4x256xf32>
    %26 = vector.broadcast %1 : vector<1x256xf32> to vector<4x256xf32>
    %27 = arith.mulf %25, %26 : vector<4x256xf32>
    %28 = tpu.concatenate %9, %10, %13, %16, %17, %20, %23, %24, %27 in 0 : vector<4x256xf32>, vector<4x256xf32>, vector<4x256xf32>, vector<4x256xf32>, vector<4x256xf32>, vector<4x256xf32>, vector<4x256xf32>, vector<4x256xf32>, vector<4x256xf32> -> vector<36x256xf32>
    %c0_8 = arith.constant 0 : index
    %c0_9 = arith.constant 0 : index
    %29 = vector.load %arg5[%c0_8, %c0_9] : memref<1x36xf32, #tpu.memory_space<vmem>>, vector<1x36xf32>
    %cst = arith.constant dense<0.000000e+00> : vector<1x256xf32>
    %30 = tpu.matmul %29, %28, %cst {dimension_numbers = #tpu.dot_dimension_numbers<[1], [0], [0], [1], [0, 0, 1, 1], [], []>} : vector<1x36xf32>, vector<36x256xf32>, vector<1x256xf32> -> vector<1x256xf32>
    %31 = vector.extract_strided_slice %3 {offsets = [0, 0], sizes = [4, 256], strides = [1, 1]} : vector<4x290xf32> to vector<4x256xf32>
    %32 = vector.broadcast %0 : vector<1x256xf32> to vector<4x256xf32>
    %33 = arith.mulf %31, %32 : vector<4x256xf32>
    %34 = vector.extract_strided_slice %3 {offsets = [0, 1], sizes = [4, 256], strides = [1, 1]} : vector<4x290xf32> to vector<4x256xf32>
    %35 = vector.extract_strided_slice %3 {offsets = [0, 2], sizes = [4, 256], strides = [1, 1]} : vector<4x290xf32> to vector<4x256xf32>
    %36 = vector.broadcast %1 : vector<1x256xf32> to vector<4x256xf32>
    %37 = arith.mulf %35, %36 : vector<4x256xf32>
    %38 = vector.extract_strided_slice %3 {offsets = [0, 16], sizes = [4, 256], strides = [1, 1]} : vector<4x290xf32> to vector<4x256xf32>
    %39 = vector.broadcast %0 : vector<1x256xf32> to vector<4x256xf32>
    %40 = arith.mulf %38, %39 : vector<4x256xf32>
    %41 = vector.extract_strided_slice %3 {offsets = [0, 17], sizes = [4, 256], strides = [1, 1]} : vector<4x290xf32> to vector<4x256xf32>
    %42 = vector.extract_strided_slice %3 {offsets = [0, 18], sizes = [4, 256], strides = [1, 1]} : vector<4x290xf32> to vector<4x256xf32>
    %43 = vector.broadcast %1 : vector<1x256xf32> to vector<4x256xf32>
    %44 = arith.mulf %42, %43 : vector<4x256xf32>
    %45 = vector.extract_strided_slice %3 {offsets = [0, 32], sizes = [4, 256], strides = [1, 1]} : vector<4x290xf32> to vector<4x256xf32>
    %46 = vector.broadcast %0 : vector<1x256xf32> to vector<4x256xf32>
    %47 = arith.mulf %45, %46 : vector<4x256xf32>
    %48 = vector.extract_strided_slice %3 {offsets = [0, 33], sizes = [4, 256], strides = [1, 1]} : vector<4x290xf32> to vector<4x256xf32>
    %49 = vector.extract_strided_slice %3 {offsets = [0, 34], sizes = [4, 256], strides = [1, 1]} : vector<4x290xf32> to vector<4x256xf32>
    %50 = vector.broadcast %1 : vector<1x256xf32> to vector<4x256xf32>
    %51 = arith.mulf %49, %50 : vector<4x256xf32>
    %52 = tpu.concatenate %33, %34, %37, %40, %41, %44, %47, %48, %51 in 0 : vector<4x256xf32>, vector<4x256xf32>, vector<4x256xf32>, vector<4x256xf32>, vector<4x256xf32>, vector<4x256xf32>, vector<4x256xf32>, vector<4x256xf32>, vector<4x256xf32> -> vector<36x256xf32>
    %c0_10 = arith.constant 0 : index
    %c0_11 = arith.constant 0 : index
    %53 = vector.load %arg6[%c0_10, %c0_11] : memref<1x36xf32, #tpu.memory_space<vmem>>, vector<1x36xf32>
    %cst_12 = arith.constant dense<0.000000e+00> : vector<1x256xf32>
    %54 = tpu.matmul %53, %52, %cst_12 {dimension_numbers = #tpu.dot_dimension_numbers<[1], [0], [0], [1], [0, 0, 1, 1], [], []>} : vector<1x36xf32>, vector<36x256xf32>, vector<1x256xf32> -> vector<1x256xf32>
    %55 = arith.addf %30, %54 : vector<1x256xf32>
    %56 = arith.negf %55 : vector<1x256xf32>
    %57 = math.exp %56 : vector<1x256xf32>
    %cst_13 = arith.constant 1.000000e+00 : f32
    %58 = vector.broadcast %cst_13 : f32 to vector<1x256xf32>
    %59 = arith.addf %58, %57 : vector<1x256xf32>
    %60 = arith.divf %58, %59 : vector<1x256xf32>
    %cst_14 = arith.constant 0.000000e+00 : f32
    %61 = vector.broadcast %cst_14 : f32 to vector<1x17xf32>
    %62 = tpu.concatenate %61, %60, %61 in 1 : vector<1x17xf32>, vector<1x256xf32>, vector<1x17xf32> -> vector<1x290xf32>
    %63 = vector.extract_strided_slice %62 {offsets = [0, 0], sizes = [1, 256], strides = [1, 1]} : vector<1x290xf32> to vector<1x256xf32>
    %64 = vector.shape_cast %63 : vector<1x256xf32> to vector<1x256xf32>
    %65 = vector.broadcast %64 : vector<1x256xf32> to vector<4x256xf32>
    %66 = vector.extract_strided_slice %62 {offsets = [0, 1], sizes = [1, 256], strides = [1, 1]} : vector<1x290xf32> to vector<1x256xf32>
    %67 = vector.shape_cast %66 : vector<1x256xf32> to vector<1x256xf32>
    %68 = vector.broadcast %67 : vector<1x256xf32> to vector<4x256xf32>
    %69 = vector.extract_strided_slice %62 {offsets = [0, 2], sizes = [1, 256], strides = [1, 1]} : vector<1x290xf32> to vector<1x256xf32>
    %70 = vector.shape_cast %69 : vector<1x256xf32> to vector<1x256xf32>
    %71 = vector.broadcast %70 : vector<1x256xf32> to vector<4x256xf32>
    %72 = vector.extract_strided_slice %62 {offsets = [0, 16], sizes = [1, 256], strides = [1, 1]} : vector<1x290xf32> to vector<1x256xf32>
    %73 = vector.shape_cast %72 : vector<1x256xf32> to vector<1x256xf32>
    %74 = vector.broadcast %73 : vector<1x256xf32> to vector<4x256xf32>
    %75 = vector.extract_strided_slice %62 {offsets = [0, 17], sizes = [1, 256], strides = [1, 1]} : vector<1x290xf32> to vector<1x256xf32>
    %76 = vector.shape_cast %75 : vector<1x256xf32> to vector<1x256xf32>
    %77 = vector.broadcast %76 : vector<1x256xf32> to vector<4x256xf32>
    %78 = vector.extract_strided_slice %62 {offsets = [0, 18], sizes = [1, 256], strides = [1, 1]} : vector<1x290xf32> to vector<1x256xf32>
    %79 = vector.shape_cast %78 : vector<1x256xf32> to vector<1x256xf32>
    %80 = vector.broadcast %79 : vector<1x256xf32> to vector<4x256xf32>
    %81 = vector.extract_strided_slice %62 {offsets = [0, 32], sizes = [1, 256], strides = [1, 1]} : vector<1x290xf32> to vector<1x256xf32>
    %82 = vector.shape_cast %81 : vector<1x256xf32> to vector<1x256xf32>
    %83 = vector.broadcast %82 : vector<1x256xf32> to vector<4x256xf32>
    %84 = vector.extract_strided_slice %62 {offsets = [0, 33], sizes = [1, 256], strides = [1, 1]} : vector<1x290xf32> to vector<1x256xf32>
    %85 = vector.shape_cast %84 : vector<1x256xf32> to vector<1x256xf32>
    %86 = vector.broadcast %85 : vector<1x256xf32> to vector<4x256xf32>
    %87 = vector.extract_strided_slice %62 {offsets = [0, 34], sizes = [1, 256], strides = [1, 1]} : vector<1x290xf32> to vector<1x256xf32>
    %88 = vector.shape_cast %87 : vector<1x256xf32> to vector<1x256xf32>
    %89 = vector.broadcast %88 : vector<1x256xf32> to vector<4x256xf32>
    %90 = tpu.concatenate %65, %68, %71, %74, %77, %80, %83, %86, %89 in 0 : vector<4x256xf32>, vector<4x256xf32>, vector<4x256xf32>, vector<4x256xf32>, vector<4x256xf32>, vector<4x256xf32>, vector<4x256xf32>, vector<4x256xf32>, vector<4x256xf32> -> vector<36x256xf32>
    %c0_15 = arith.constant 0 : index
    %c0_16 = arith.constant 0 : index
    %91 = vector.load %arg7[%c0_15, %c0_16] : memref<8x36xf32, #tpu.memory_space<vmem>>, vector<8x36xf32>
    %92 = arith.mulf %90, %52 : vector<36x256xf32>
    %cst_17 = arith.constant dense<0.000000e+00> : vector<8x256xf32>
    %93 = tpu.matmul %91, %92, %cst_17 {dimension_numbers = #tpu.dot_dimension_numbers<[1], [0], [0], [1], [0, 0, 1, 1], [], []>} : vector<8x36xf32>, vector<36x256xf32>, vector<8x256xf32> -> vector<8x256xf32>
    %c0_18 = arith.constant 0 : index
    %c0_19 = arith.constant 0 : index
    %94 = vector.load %arg9[%c0_18, %c0_19] : memref<8x1xf32, #tpu.memory_space<vmem>>, vector<8x1xf32>
    %95 = vector.broadcast %94 : vector<8x1xf32> to vector<8x256xf32>
    %96 = arith.mulf %93, %95 : vector<8x256xf32>
    %c0_20 = arith.constant 0 : index
    %c0_21 = arith.constant 0 : index
    %97 = vector.load %arg10[%c0_20, %c0_21] : memref<8x1xf32, #tpu.memory_space<vmem>>, vector<8x1xf32>
    %98 = vector.broadcast %97 : vector<8x1xf32> to vector<8x256xf32>
    %99 = arith.addf %96, %98 : vector<8x256xf32>
    %cst_22 = arith.constant 0.000000e+00 : f32
    %100 = vector.broadcast %cst_22 : f32 to vector<8x256xf32>
    %101 = arith.maximumf %99, %100 : vector<8x256xf32>
    %102 = vector.extract_strided_slice %101 {offsets = [0, 0], sizes = [8, 224], strides = [1, 1]} : vector<8x256xf32> to vector<8x224xf32>
    %103 = vector.extract_strided_slice %101 {offsets = [0, 16], sizes = [8, 224], strides = [1, 1]} : vector<8x256xf32> to vector<8x224xf32>
    %104 = arith.maximumf %102, %103 : vector<8x224xf32>
    %105 = vector.extract_strided_slice %101 {offsets = [0, 32], sizes = [8, 224], strides = [1, 1]} : vector<8x256xf32> to vector<8x224xf32>
    %106 = arith.maximumf %104, %105 : vector<8x224xf32>
    %107 = vector.extract_strided_slice %106 {offsets = [0, 0], sizes = [8, 222], strides = [1, 1]} : vector<8x224xf32> to vector<8x222xf32>
    %108 = vector.extract_strided_slice %106 {offsets = [0, 1], sizes = [8, 222], strides = [1, 1]} : vector<8x224xf32> to vector<8x222xf32>
    %109 = arith.maximumf %107, %108 : vector<8x222xf32>
    %110 = vector.extract_strided_slice %106 {offsets = [0, 2], sizes = [8, 222], strides = [1, 1]} : vector<8x224xf32> to vector<8x222xf32>
    %111 = arith.maximumf %109, %110 : vector<8x222xf32>
    %cst_23 = arith.constant 0.000000e+00 : f32
    %112 = vector.broadcast %cst_23 : f32 to vector<8x51xf32>
    %cst_24 = arith.constant 0.000000e+00 : f32
    %113 = vector.broadcast %cst_24 : f32 to vector<8x34xf32>
    %114 = tpu.concatenate %112, %111, %113 in 1 : vector<8x51xf32>, vector<8x222xf32>, vector<8x34xf32> -> vector<8x307xf32>
    %c0_25 = arith.constant 0 : index
    %c0_26 = arith.constant 0 : index
    %115 = vector.load %arg4[%c0_25, %c0_26] : memref<3x205xf32, #tpu.memory_space<vmem>>, vector<1x205xf32>
    %c1_27 = arith.constant 1 : index
    %c0_28 = arith.constant 0 : index
    %116 = vector.load %arg4[%c1_27, %c0_28] : memref<3x205xf32, #tpu.memory_space<vmem>>, vector<1x205xf32>
    %c2 = arith.constant 2 : index
    %c0_29 = arith.constant 0 : index
    %117 = vector.load %arg4[%c2, %c0_29] : memref<3x205xf32, #tpu.memory_space<vmem>>, vector<1x205xf32>
    %118 = vector.extract_strided_slice %114 {offsets = [0, 0], sizes = [8, 205], strides = [1, 1]} : vector<8x307xf32> to vector<8x205xf32>
    %119 = vector.broadcast %115 : vector<1x205xf32> to vector<8x205xf32>
    %120 = arith.mulf %118, %119 : vector<8x205xf32>
    %121 = vector.extract_strided_slice %114 {offsets = [0, 3], sizes = [8, 205], strides = [1, 1]} : vector<8x307xf32> to vector<8x205xf32>
    %122 = vector.extract_strided_slice %114 {offsets = [0, 6], sizes = [8, 205], strides = [1, 1]} : vector<8x307xf32> to vector<8x205xf32>
    %123 = vector.broadcast %116 : vector<1x205xf32> to vector<8x205xf32>
    %124 = arith.mulf %122, %123 : vector<8x205xf32>
    %125 = vector.extract_strided_slice %114 {offsets = [0, 48], sizes = [8, 205], strides = [1, 1]} : vector<8x307xf32> to vector<8x205xf32>
    %126 = vector.broadcast %115 : vector<1x205xf32> to vector<8x205xf32>
    %127 = arith.mulf %125, %126 : vector<8x205xf32>
    %128 = vector.extract_strided_slice %114 {offsets = [0, 51], sizes = [8, 205], strides = [1, 1]} : vector<8x307xf32> to vector<8x205xf32>
    %129 = vector.extract_strided_slice %114 {offsets = [0, 54], sizes = [8, 205], strides = [1, 1]} : vector<8x307xf32> to vector<8x205xf32>
    %130 = vector.broadcast %116 : vector<1x205xf32> to vector<8x205xf32>
    %131 = arith.mulf %129, %130 : vector<8x205xf32>
    %132 = vector.extract_strided_slice %114 {offsets = [0, 96], sizes = [8, 205], strides = [1, 1]} : vector<8x307xf32> to vector<8x205xf32>
    %133 = vector.broadcast %115 : vector<1x205xf32> to vector<8x205xf32>
    %134 = arith.mulf %132, %133 : vector<8x205xf32>
    %135 = vector.extract_strided_slice %114 {offsets = [0, 99], sizes = [8, 205], strides = [1, 1]} : vector<8x307xf32> to vector<8x205xf32>
    %136 = vector.extract_strided_slice %114 {offsets = [0, 102], sizes = [8, 205], strides = [1, 1]} : vector<8x307xf32> to vector<8x205xf32>
    %137 = vector.broadcast %116 : vector<1x205xf32> to vector<8x205xf32>
    %138 = arith.mulf %136, %137 : vector<8x205xf32>
    %139 = tpu.concatenate %120, %121, %124, %127, %128, %131, %134, %135, %138 in 0 : vector<8x205xf32>, vector<8x205xf32>, vector<8x205xf32>, vector<8x205xf32>, vector<8x205xf32>, vector<8x205xf32>, vector<8x205xf32>, vector<8x205xf32>, vector<8x205xf32> -> vector<72x205xf32>
    %c0_30 = arith.constant 0 : index
    %c0_31 = arith.constant 0 : index
    %140 = vector.load %arg8[%c0_30, %c0_31] : memref<4x72xf32, #tpu.memory_space<vmem>>, vector<4x72xf32>
    %cst_32 = arith.constant dense<0.000000e+00> : vector<4x205xf32>
    %141 = tpu.matmul %140, %139, %cst_32 {dimension_numbers = #tpu.dot_dimension_numbers<[1], [0], [0], [1], [0, 0, 1, 1], [], []>} : vector<4x72xf32>, vector<72x205xf32>, vector<4x205xf32> -> vector<4x205xf32>
    %c0_33 = arith.constant 0 : index
    %c0_34 = arith.constant 0 : index
    %142 = vector.load %arg11[%c0_33, %c0_34] : memref<4x1xf32, #tpu.memory_space<vmem>>, vector<4x1xf32>
    %143 = vector.broadcast %142 : vector<4x1xf32> to vector<4x205xf32>
    %144 = arith.mulf %141, %143 : vector<4x205xf32>
    %c0_35 = arith.constant 0 : index
    %c0_36 = arith.constant 0 : index
    %145 = vector.load %arg12[%c0_35, %c0_36] : memref<4x1xf32, #tpu.memory_space<vmem>>, vector<4x1xf32>
    %146 = vector.broadcast %145 : vector<4x1xf32> to vector<4x205xf32>
    %147 = arith.addf %144, %146 : vector<4x205xf32>
    %cst_37 = arith.constant 0.000000e+00 : f32
    %148 = vector.broadcast %cst_37 : f32 to vector<4x205xf32>
    %149 = arith.maximumf %147, %148 : vector<4x205xf32>
    %150 = vector.broadcast %117 : vector<1x205xf32> to vector<4x205xf32>
    %151 = arith.mulf %149, %150 : vector<4x205xf32>
    %cst_38 = arith.constant dense<0.000000e+00> : vector<4xf32>
    %152 = vector.multi_reduction <add>, %151, %cst_38 [1] : vector<4x205xf32> to vector<4xf32>
    %153 = vector.shape_cast %152 : vector<4xf32> to vector<4x1xf32>
    %c0_39 = arith.constant 0 : index
    %c0_40 = arith.constant 0 : index
    %154 = vector.load %arg13[%c0_39, %c0_40] : memref<4x2xf32, #tpu.memory_space<vmem>>, vector<4x2xf32>
    %155 = vector.broadcast %153 : vector<4x1xf32> to vector<4x2xf32>
    %156 = arith.mulf %154, %155 : vector<4x2xf32>
    %cst_41 = arith.constant dense<0.000000e+00> : vector<2xf32>
    %157 = vector.multi_reduction <add>, %156, %cst_41 [0] : vector<4x2xf32> to vector<2xf32>
    %158 = vector.shape_cast %157 : vector<2xf32> to vector<1x2xf32>
    %c0_42 = arith.constant 0 : index
    %c0_43 = arith.constant 0 : index
    %159 = vector.load %arg14[%c0_42, %c0_43] : memref<1x2xf32, #tpu.memory_space<vmem>>, vector<1x2xf32>
    %160 = arith.addf %158, %159 : vector<1x2xf32>
    %cst_44 = arith.constant dense<0xFF800000> : vector<1xf32>
    %161 = vector.multi_reduction <maximumf>, %160, %cst_44 [1] : vector<1x2xf32> to vector<1xf32>
    %162 = vector.shape_cast %161 : vector<1xf32> to vector<1x1xf32>
    %163 = vector.broadcast %162 : vector<1x1xf32> to vector<1x2xf32>
    %164 = arith.subf %160, %163 : vector<1x2xf32>
    %165 = math.exp %164 : vector<1x2xf32>
    %cst_45 = arith.constant dense<0.000000e+00> : vector<1xf32>
    %166 = vector.multi_reduction <add>, %165, %cst_45 [1] : vector<1x2xf32> to vector<1xf32>
    %167 = vector.shape_cast %166 : vector<1xf32> to vector<1x1xf32>
    %168 = vector.broadcast %167 : vector<1x1xf32> to vector<1x2xf32>
    %169 = arith.divf %165, %168 : vector<1x2xf32>
    %c0_46 = arith.constant 0 : index
    %c0_47 = arith.constant 0 : index
    %c0_48 = arith.constant 0 : index
    %170 = vector.load %arg15[%c0_46, %c0_47, %c0_48] : memref<1x1x2xf32, #tpu.memory_space<vmem>>, vector<1x1x2xf32>
    %171 = vector.shape_cast %170 : vector<1x1x2xf32> to vector<1x2xf32>
    %172 = vector.shape_cast %169 : vector<1x2xf32> to vector<1x1x2xf32>
    tpu.vector_store %arg15[%c0_46, %c0_47, %c0_48], %172 {strides = array<i32>} : memref<1x1x2xf32, #tpu.memory_space<vmem>>, vector<1x1x2xf32>,
    return
  }
  func.func @transform_0(%arg0: i32) -> (i32, i32, i32) {
    %c0_i32 = arith.constant 0 : i32
    %c0_i32_0 = arith.constant 0 : i32
    %c0_i32_1 = arith.constant 0 : i32
    return %arg0, %c0_i32, %c0_i32_0 : i32, i32, i32
  }
  func.func @transform_1(%arg0: i32) -> (i32, i32, i32) {
    %c0_i32 = arith.constant 0 : i32
    %c0_i32_0 = arith.constant 0 : i32
    %c0_i32_1 = arith.constant 0 : i32
    return %arg0, %c0_i32, %c0_i32_0 : i32, i32, i32
  }
  func.func @transform_2(%arg0: i32) -> (i32, i32) {
    %c0_i32 = arith.constant 0 : i32
    %c0_i32_0 = arith.constant 0 : i32
    %c0_i32_1 = arith.constant 0 : i32
    return %c0_i32, %c0_i32_0 : i32, i32
  }
  func.func @transform_3(%arg0: i32) -> (i32, i32) {
    %c0_i32 = arith.constant 0 : i32
    %c0_i32_0 = arith.constant 0 : i32
    %c0_i32_1 = arith.constant 0 : i32
    return %c0_i32, %c0_i32_0 : i32, i32
  }
  func.func @transform_4(%arg0: i32) -> (i32, i32) {
    %c0_i32 = arith.constant 0 : i32
    %c0_i32_0 = arith.constant 0 : i32
    %c0_i32_1 = arith.constant 0 : i32
    return %c0_i32, %c0_i32_0 : i32, i32
  }
  func.func @transform_5(%arg0: i32) -> (i32, i32) {
    %c0_i32 = arith.constant 0 : i32
    %c0_i32_0 = arith.constant 0 : i32
    %c0_i32_1 = arith.constant 0 : i32
    return %c0_i32, %c0_i32_0 : i32, i32
  }
  func.func @transform_6(%arg0: i32) -> (i32, i32) {
    %c0_i32 = arith.constant 0 : i32
    %c0_i32_0 = arith.constant 0 : i32
    %c0_i32_1 = arith.constant 0 : i32
    return %c0_i32, %c0_i32_0 : i32, i32
  }
  func.func @transform_7(%arg0: i32) -> (i32, i32) {
    %c0_i32 = arith.constant 0 : i32
    %c0_i32_0 = arith.constant 0 : i32
    %c0_i32_1 = arith.constant 0 : i32
    return %c0_i32, %c0_i32_0 : i32, i32
  }
  func.func @transform_8(%arg0: i32) -> (i32, i32) {
    %c0_i32 = arith.constant 0 : i32
    %c0_i32_0 = arith.constant 0 : i32
    %c0_i32_1 = arith.constant 0 : i32
    return %c0_i32, %c0_i32_0 : i32, i32
  }
  func.func @transform_9(%arg0: i32) -> (i32, i32) {
    %c0_i32 = arith.constant 0 : i32
    %c0_i32_0 = arith.constant 0 : i32
    %c0_i32_1 = arith.constant 0 : i32
    return %c0_i32, %c0_i32_0 : i32, i32
  }
  func.func @transform_10(%arg0: i32) -> (i32, i32) {
    %c0_i32 = arith.constant 0 : i32
    %c0_i32_0 = arith.constant 0 : i32
    %c0_i32_1 = arith.constant 0 : i32
    return %c0_i32, %c0_i32_0 : i32, i32
  }
  func.func @transform_11(%arg0: i32) -> (i32, i32) {
    %c0_i32 = arith.constant 0 : i32
    %c0_i32_0 = arith.constant 0 : i32
    %c0_i32_1 = arith.constant 0 : i32
    return %c0_i32, %c0_i32_0 : i32, i32
  }
  func.func @transform_12(%arg0: i32) -> (i32, i32) {
    %c0_i32 = arith.constant 0 : i32
    %c0_i32_0 = arith.constant 0 : i32
    %c0_i32_1 = arith.constant 0 : i32
    return %c0_i32, %c0_i32_0 : i32, i32
  }
  func.func @transform_13(%arg0: i32) -> (i32, i32) {
    %c0_i32 = arith.constant 0 : i32
    %c0_i32_0 = arith.constant 0 : i32
    %c0_i32_1 = arith.constant 0 : i32
    return %c0_i32, %c0_i32_0 : i32, i32
  }
  func.func @transform_14(%arg0: i32) -> (i32, i32, i32) {
    %c0_i32 = arith.constant 0 : i32
    %c0_i32_0 = arith.constant 0 : i32
    %c0_i32_1 = arith.constant 0 : i32
    return %arg0, %c0_i32, %c0_i32_0 : i32, i32, i32
  }
}

</mosaic_0001>

<llo_original>
// kernel: tpu_custom_call.1
$region0: #{tpu_custom_call.1}
  #allocation0 [shape = 'u32[]', space=smem, size = 0x4, offset = 0x4, fixed_abs, tag = 'smem constant byte address 0x4 - core index']
  #allocation1 [shape = 'u32[144,128]{1,0:T(1,128)}', space=vmem, size = 0x12000, scoped, tag = 'internal scratch']
  %s0 = inlined_call_operand.vmem [shape: f32[2,4,290], index: 0, kind: input, shape index: {}]
  %s1 = inlined_call_operand.hbm [shape: f32[2,4,290], index: 1, kind: input, shape index: {}]
  %s2 = inlined_call_operand.hbm [shape: f32[2,256], index: 2, kind: input, shape index: {}]
  %s3 = inlined_call_operand.vmem [shape: f32[3,205], index: 3, kind: input, shape index: {}]
  %s4 = inlined_call_operand.hbm [shape: f32[1,36], index: 4, kind: input, shape index: {}]
  %s5 = inlined_call_operand.hbm [shape: f32[1,36], index: 5, kind: input, shape index: {}]
  %s6 = inlined_call_operand.vmem [shape: f32[8,36], index: 6, kind: input, shape index: {}]
  %s7 = inlined_call_operand.vmem [shape: f32[4,72], index: 7, kind: input, shape index: {}]
  %s8 = inlined_call_operand.vmem [shape: f32[8,1], index: 8, kind: input, shape index: {}]
  %s9 = inlined_call_operand.vmem [shape: f32[8,1], index: 9, kind: input, shape index: {}]
  %s10 = inlined_call_operand.vmem [shape: f32[4,1], index: 10, kind: input, shape index: {}]
  %s11 = inlined_call_operand.vmem [shape: f32[4,1], index: 11, kind: input, shape index: {}]
  %s12 = inlined_call_operand.vmem [shape: f32[4,2], index: 12, kind: input, shape index: {}]
  %s13 = inlined_call_operand.vmem [shape: f32[1,2], index: 13, kind: input, shape index: {}]
  %s14 = inlined_call_operand.hbm [shape: f32[2,1,2], index: 14, kind: output, shape index: {}]
  %s15 = sld [smem:[#allocation0]]
  $region105: #{tpu_custom_call.1} parent=0
    _
  %s17 = ssub.s32 1, %s15
  %s18 = scalar_select 0, %s17, %s15
  $region1: #{tpu_custom_call.1} parent=0
    #allocation2 [shape = 'u8[12288]{0}', space=vmem, size = 0x3000, scoped, tag = 'input window, operand 1']
    #allocation3 [shape = 's32[2]{0}', space=sflag, size = 0x8, scoped, tag = 'scoped memory for tpu_custom_call.1']
    #allocation4 [shape = 's32[2]{0}', space=sflag, size = 0x8, scoped, tag = 'scoped memory for tpu_custom_call.1']
    #allocation5 [shape = 'u8[2048]{0}', space=vmem, size = 0x800, scoped, tag = 'input window, operand 2, single buffered']
    #allocation6 [shape = 's32[1]{0}', space=sflag, size = 0x4, scoped, tag = 'scoped memory for tpu_custom_call.1']
    #allocation7 [shape = 'u8[512]{0}', space=vmem, size = 0x400, scoped, tag = 'input window, operand 4, single buffered']
    #allocation8 [shape = 'u8[512]{0}', space=vmem, size = 0x400, scoped, tag = 'input window, operand 5, single buffered']
    #allocation9 [shape = 's32[1]{0}', space=sflag, size = 0x4, scoped, tag = 'scoped memory for tpu_custom_call.1']
    #allocation10 [shape = 'u8[1024]{0}', space=vmem, size = 0x400, scoped, tag = 'output window, operand 0']
    %19 = vsyncpa [#allocation3], 0
    %s20 = scalar_lea.sflag [#allocation3], 1
    %21 = vsyncpa %s20, 0
    %22 = vsyncpa [#allocation6], 0
    %23 = vsyncpa [#allocation9], 0
    %24 = vsyncpa [#allocation4], 0
    %s25 = scalar_lea.sflag [#allocation4], 1
    %26 = vsyncpa %s25, 0
    loop: start=0, step=1, limit=4
    $region2: #{tpu_custom_call.1} parent=1 // loop_pre_header
      _
    $region3: #{tpu_custom_call.1} parent=1 // loop_header
      %s28 = sphi 0, %s32
      %p29 = scmp.ge.s32.totalorder %s28, 4
      %s38 = sphi 0, %s40
      %s41 = sphi 0, %s38
      %s42 = sphi 0, %s41
      %s58 = sphi 0, %s42
      %s64 = sphi 0, %s66
      %s67 = sphi 0, %s64
      %s68 = sphi 0, %s67
      %s84 = sphi 0, %s68
      %s88 = sphi 0, %s88
      %s90 = sphi 0, %s88
      %s91 = sphi 0, %s90
      %s105 = sphi 0, %s91
      %s109 = sphi 0, %s109
      %s111 = sphi 0, %s109
      %s112 = sphi 0, %s111
      %s126 = sphi 0, %s112
      %s130 = sphi 0, %s130
      %s132 = sphi 0, %s130
      %s133 = sphi 0, %s132
      %s147 = sphi 0, %s133
      %s151 = sphi 0, %s151
      %s153 = sphi 0, %s151
      %s154 = sphi 0, %s153
      %s168 = sphi 0, %s154
      %s172 = sphi 0, %s172
      %s174 = sphi 0, %s172
      %s175 = sphi 0, %s174
      %s189 = sphi 0, %s175
      %s193 = sphi 0, %s193
      %s195 = sphi 0, %s193
      %s196 = sphi 0, %s195
      %s210 = sphi 0, %s196
      %s214 = sphi 0, %s214
      %s216 = sphi 0, %s214
      %s217 = sphi 0, %s216
      %s231 = sphi 0, %s217
      %s235 = sphi 0, %s235
      %s237 = sphi 0, %s235
      %s238 = sphi 0, %s237
      %s252 = sphi 0, %s238
      %s256 = sphi 0, %s256
      %s258 = sphi 0, %s256
      %s259 = sphi 0, %s258
      %s273 = sphi 0, %s259
      %s277 = sphi 0, %s277
      %s279 = sphi 0, %s277
      %s280 = sphi 0, %s279
      %s294 = sphi 0, %s280
      %s298 = sphi 0, %s298
      %s300 = sphi 0, %s298
      %s301 = sphi 0, %s300
      %s315 = sphi 0, %s301
      %s319 = sphi 0, %s319
      %s321 = sphi 0, %s319
      %s322 = sphi 0, %s321
      %s336 = sphi 0, %s322
      %s342 = sphi 0, %s344
      %s345 = sphi 0, %s342
      %s346 = sphi 0, %s345
      %s362 = sphi 0, %s346
    $region4: #{tpu_custom_call.1} parent=1 // loop_header_branch
      %31 = sbr.rel (%p29) target = $region8
    $region5: #{tpu_custom_call.1} parent=1 // loop_body
      %s33 = ssub.s32 %s28, 1
      %s34 = ssub.s32 %s28, 2
      %s35 = sadd.s32 %s28, 1
      %s36 = ssub.s32 %s28, %s35
      %p37 = scmp.eq.s32.totalorder %s36, 0
      %s39 = sadd.s32 %s38, 1
      %s40 = scalar_select %p37, %s38, %s39
      %p43 = pneg %p37
      %p44 = scmp.eq.s32.totalorder %s28, 1
      %p45 = por %p43, %p44
      %p46 = scmp.ne.s32.totalorder %s38, %s41
      %p47 = scmp.eq.s32.totalorder %s28, 0
      %p48 = por %p46, %p47
      %p49 = scmp.ne.s32.totalorder %s38, %s41
      %p50 = scmp.eq.s32.totalorder %s33, 1
      %p51 = por %p49, %p50
      %p52 = scmp.ne.s32.totalorder %s41, %s42
      %p53 = scmp.eq.s32.totalorder %s33, 0
      %p54 = por %p52, %p53
      %p55 = scmp.ne.s32.totalorder %s41, %s42
      %p56 = scmp.eq.s32.totalorder %s34, 1
      %p57 = por %p55, %p56
      %p59 = scmp.ne.s32.totalorder %s42, %s58
      %p60 = scmp.eq.s32.totalorder %s34, 0
      %p61 = por %p59, %p60
      %s62 = ssub.s32 %s28, %s35
      %p63 = scmp.eq.s32.totalorder %s62, 0
      %s65 = sadd.s32 %s64, 1
      %s66 = scalar_select %p63, %s64, %s65
      %p69 = pneg %p63
      %p70 = scmp.eq.s32.totalorder %s28, 1
      %p71 = por %p69, %p70
      %p72 = scmp.ne.s32.totalorder %s64, %s67
      %p73 = scmp.eq.s32.totalorder %s28, 0
      %p74 = por %p72, %p73
      %p75 = scmp.ne.s32.totalorder %s64, %s67
      %p76 = scmp.eq.s32.totalorder %s33, 1
      %p77 = por %p75, %p76
      %p78 = scmp.ne.s32.totalorder %s67, %s68
      %p79 = scmp.eq.s32.totalorder %s33, 0
      %p80 = por %p78, %p79
      %p81 = scmp.ne.s32.totalorder %s67, %s68
      %p82 = scmp.eq.s32.totalorder %s34, 1
      %p83 = por %p81, %p82
      %p85 = scmp.ne.s32.totalorder %s68, %s84
      %p86 = scmp.eq.s32.totalorder %s34, 0
      %p87 = por %p85, %p86
      %s89 = sadd.s32 %s88, 1
      %p92 = scmp.eq.s32.totalorder %s28, 1
      %p93 = scmp.ne.s32.totalorder %s88, %s90
      %p94 = scmp.eq.s32.totalorder %s28, 0
      %p95 = por %p93, %p94
      %p96 = scmp.ne.s32.totalorder %s88, %s90
      %p97 = scmp.eq.s32.totalorder %s33, 1
      %p98 = por %p96, %p97
      %p99 = scmp.ne.s32.totalorder %s90, %s91
      %p100 = scmp.eq.s32.totalorder %s33, 0
      %p101 = por %p99, %p100
      %p102 = scmp.ne.s32.totalorder %s90, %s91
      %p103 = scmp.eq.s32.totalorder %s34, 1
      %p104 = por %p102, %p103
      %p106 = scmp.ne.s32.totalorder %s91, %s105
      %p107 = scmp.eq.s32.totalorder %s34, 0
      %p108 = por %p106, %p107
      %s110 = sadd.s32 %s109, 1
      %p113 = scmp.eq.s32.totalorder %s28, 1
      %p114 = scmp.ne.s32.totalorder %s109, %s111
      %p115 = scmp.eq.s32.totalorder %s28, 0
      %p116 = por %p114, %p115
      %p117 = scmp.ne.s32.totalorder %s109, %s111
      %p118 = scmp.eq.s32.totalorder %s33, 1
      %p119 = por %p117, %p118
      %p120 = scmp.ne.s32.totalorder %s111, %s112
      %p121 = scmp.eq.s32.totalorder %s33, 0
      %p122 = por %p120, %p121
      %p123 = scmp.ne.s32.totalorder %s111, %s112
      %p124 = scmp.eq.s32.totalorder %s34, 1
      %p125 = por %p123, %p124
      %p127 = scmp.ne.s32.totalorder %s112, %s126
      %p128 = scmp.eq.s32.totalorder %s34, 0
      %p129 = por %p127, %p128
      %s131 = sadd.s32 %s130, 1
      %p134 = scmp.eq.s32.totalorder %s28, 1
      %p135 = scmp.ne.s32.totalorder %s130, %s132
      %p136 = scmp.eq.s32.totalorder %s28, 0
      %p137 = por %p135, %p136
      %p138 = scmp.ne.s32.totalorder %s130, %s132
      %p139 = scmp.eq.s32.totalorder %s33, 1
      %p140 = por %p138, %p139
      %p141 = scmp.ne.s32.totalorder %s132, %s133
      %p142 = scmp.eq.s32.totalorder %s33, 0
      %p143 = por %p141, %p142
      %p144 = scmp.ne.s32.totalorder %s132, %s133
      %p145 = scmp.eq.s32.totalorder %s34, 1
      %p146 = por %p144, %p145
      %p148 = scmp.ne.s32.totalorder %s133, %s147
      %p149 = scmp.eq.s32.totalorder %s34, 0
      %p150 = por %p148, %p149
      %s152 = sadd.s32 %s151, 1
      %p155 = scmp.eq.s32.totalorder %s28, 1
      %p156 = scmp.ne.s32.totalorder %s151, %s153
      %p157 = scmp.eq.s32.totalorder %s28, 0
      %p158 = por %p156, %p157
      %p159 = scmp.ne.s32.totalorder %s151, %s153
      %p160 = scmp.eq.s32.totalorder %s33, 1
      %p161 = por %p159, %p160
      %p162 = scmp.ne.s32.totalorder %s153, %s154
      %p163 = scmp.eq.s32.totalorder %s33, 0
      %p164 = por %p162, %p163
      %p165 = scmp.ne.s32.totalorder %s153, %s154
      %p166 = scmp.eq.s32.totalorder %s34, 1
      %p167 = por %p165, %p166
      %p169 = scmp.ne.s32.totalorder %s154, %s168
      %p170 = scmp.eq.s32.totalorder %s34, 0
      %p171 = por %p169, %p170
      %s173 = sadd.s32 %s172, 1
      %p176 = scmp.eq.s32.totalorder %s28, 1
      %p177 = scmp.ne.s32.totalorder %s172, %s174
      %p178 = scmp.eq.s32.totalorder %s28, 0
      %p179 = por %p177, %p178
      %p180 = scmp.ne.s32.totalorder %s172, %s174
      %p181 = scmp.eq.s32.totalorder %s33, 1
      %p182 = por %p180, %p181
      %p183 = scmp.ne.s32.totalorder %s174, %s175
      %p184 = scmp.eq.s32.totalorder %s33, 0
      %p185 = por %p183, %p184
      %p186 = scmp.ne.s32.totalorder %s174, %s175
      %p187 = scmp.eq.s32.totalorder %s34, 1
      %p188 = por %p186, %p187
      %p190 = scmp.ne.s32.totalorder %s175, %s189
      %p191 = scmp.eq.s32.totalorder %s34, 0
      %p192 = por %p190, %p191
      %s194 = sadd.s32 %s193, 1
      %p197 = scmp.eq.s32.totalorder %s28, 1
      %p198 = scmp.ne.s32.totalorder %s193, %s195
      %p199 = scmp.eq.s32.totalorder %s28, 0
      %p200 = por %p198, %p199
      %p201 = scmp.ne.s32.totalorder %s193, %s195
      %p202 = scmp.eq.s32.totalorder %s33, 1
      %p203 = por %p201, %p202
      %p204 = scmp.ne.s32.totalorder %s195, %s196
      %p205 = scmp.eq.s32.totalorder %s33, 0
      %p206 = por %p204, %p205
      %p207 = scmp.ne.s32.totalorder %s195, %s196
      %p208 = scmp.eq.s32.totalorder %s34, 1
      %p209 = por %p207, %p208
      %p211 = scmp.ne.s32.totalorder %s196, %s210
      %p212 = scmp.eq.s32.totalorder %s34, 0
      %p213 = por %p211, %p212
      %s215 = sadd.s32 %s214, 1
      %p218 = scmp.eq.s32.totalorder %s28, 1
      %p219 = scmp.ne.s32.totalorder %s214, %s216
      %p220 = scmp.eq.s32.totalorder %s28, 0
      %p221 = por %p219, %p220
      %p222 = scmp.ne.s32.totalorder %s214, %s216
      %p223 = scmp.eq.s32.totalorder %s33, 1
      %p224 = por %p222, %p223
      %p225 = scmp.ne.s32.totalorder %s216, %s217
      %p226 = scmp.eq.s32.totalorder %s33, 0
      %p227 = por %p225, %p226
      %p228 = scmp.ne.s32.totalorder %s216, %s217
      %p229 = scmp.eq.s32.totalorder %s34, 1
      %p230 = por %p228, %p229
      %p232 = scmp.ne.s32.totalorder %s217, %s231
      %p233 = scmp.eq.s32.totalorder %s34, 0
      %p234 = por %p232, %p233
      %s236 = sadd.s32 %s235, 1
      %p239 = scmp.eq.s32.totalorder %s28, 1
      %p240 = scmp.ne.s32.totalorder %s235, %s237
      %p241 = scmp.eq.s32.totalorder %s28, 0
      %p242 = por %p240, %p241
      %p243 = scmp.ne.s32.totalorder %s235, %s237
      %p244 = scmp.eq.s32.totalorder %s33, 1
      %p245 = por %p243, %p244
      %p246 = scmp.ne.s32.totalorder %s237, %s238
      %p247 = scmp.eq.s32.totalorder %s33, 0
      %p248 = por %p246, %p247
      %p249 = scmp.ne.s32.totalorder %s237, %s238
      %p250 = scmp.eq.s32.totalorder %s34, 1
      %p251 = por %p249, %p250
      %p253 = scmp.ne.s32.totalorder %s238, %s252
      %p254 = scmp.eq.s32.totalorder %s34, 0
      %p255 = por %p253, %p254
      %s257 = sadd.s32 %s256, 1
      %p260 = scmp.eq.s32.totalorder %s28, 1
      %p261 = scmp.ne.s32.totalorder %s256, %s258
      %p262 = scmp.eq.s32.totalorder %s28, 0
      %p263 = por %p261, %p262
      %p264 = scmp.ne.s32.totalorder %s256, %s258
      %p265 = scmp.eq.s32.totalorder %s33, 1
      %p266 = por %p264, %p265
      %p267 = scmp.ne.s32.totalorder %s258, %s259
      %p268 = scmp.eq.s32.totalorder %s33, 0
      %p269 = por %p267, %p268
      %p270 = scmp.ne.s32.totalorder %s258, %s259
      %p271 = scmp.eq.s32.totalorder %s34, 1
      %p272 = por %p270, %p271
      %p274 = scmp.ne.s32.totalorder %s259, %s273
      %p275 = scmp.eq.s32.totalorder %s34, 0
      %p276 = por %p274, %p275
      %s278 = sadd.s32 %s277, 1
      %p281 = scmp.eq.s32.totalorder %s28, 1
      %p282 = scmp.ne.s32.totalorder %s277, %s279
      %p283 = scmp.eq.s32.totalorder %s28, 0
      %p284 = por %p282, %p283
      %p285 = scmp.ne.s32.totalorder %s277, %s279
      %p286 = scmp.eq.s32.totalorder %s33, 1
      %p287 = por %p285, %p286
      %p288 = scmp.ne.s32.totalorder %s279, %s280
      %p289 = scmp.eq.s32.totalorder %s33, 0
      %p290 = por %p288, %p289
      %p291 = scmp.ne.s32.totalorder %s279, %s280
      %p292 = scmp.eq.s32.totalorder %s34, 1
      %p293 = por %p291, %p292
      %p295 = scmp.ne.s32.totalorder %s280, %s294
      %p296 = scmp.eq.s32.totalorder %s34, 0
      %p297 = por %p295, %p296
      %s299 = sadd.s32 %s298, 1
      %p302 = scmp.eq.s32.totalorder %s28, 1
      %p303 = scmp.ne.s32.totalorder %s298, %s300
      %p304 = scmp.eq.s32.totalorder %s28, 0
      %p305 = por %p303, %p304
      %p306 = scmp.ne.s32.totalorder %s298, %s300
      %p307 = scmp.eq.s32.totalorder %s33, 1
      %p308 = por %p306, %p307
      %p309 = scmp.ne.s32.totalorder %s300, %s301
      %p310 = scmp.eq.s32.totalorder %s33, 0
      %p311 = por %p309, %p310
      %p312 = scmp.ne.s32.totalorder %s300, %s301
      %p313 = scmp.eq.s32.totalorder %s34, 1
      %p314 = por %p312, %p313
      %p316 = scmp.ne.s32.totalorder %s301, %s315
      %p317 = scmp.eq.s32.totalorder %s34, 0
      %p318 = por %p316, %p317
      %s320 = sadd.s32 %s319, 1
      %p323 = scmp.eq.s32.totalorder %s28, 1
      %p324 = scmp.ne.s32.totalorder %s319, %s321
      %p325 = scmp.eq.s32.totalorder %s28, 0
      %p326 = por %p324, %p325
      %p327 = scmp.ne.s32.totalorder %s319, %s321
      %p328 = scmp.eq.s32.totalorder %s33, 1
      %p329 = por %p327, %p328
      %p330 = scmp.ne.s32.totalorder %s321, %s322
      %p331 = scmp.eq.s32.totalorder %s33, 0
      %p332 = por %p330, %p331
      %p333 = scmp.ne.s32.totalorder %s321, %s322
      %p334 = scmp.eq.s32.totalorder %s34, 1
      %p335 = por %p333, %p334
      %p337 = scmp.ne.s32.totalorder %s322, %s336
      %p338 = scmp.eq.s32.totalorder %s34, 0
      %p339 = por %p337, %p338
      %s340 = ssub.s32 %s28, %s35
      %p341 = scmp.eq.s32.totalorder %s340, 0
      %s343 = sadd.s32 %s342, 1
      %s344 = scalar_select %p341, %s342, %s343
      %p347 = pneg %p341
      %p348 = scmp.eq.s32.totalorder %s28, 1
      %p349 = por %p347, %p348
      %p350 = scmp.ne.s32.totalorder %s342, %s345
      %p351 = scmp.eq.s32.totalorder %s28, 0
      %p352 = por %p350, %p351
      %p353 = scmp.ne.s32.totalorder %s342, %s345
      %p354 = scmp.eq.s32.totalorder %s33, 1
      %p355 = por %p353, %p354
      %p356 = scmp.ne.s32.totalorder %s345, %s346
      %p357 = scmp.eq.s32.totalorder %s33, 0
      %p358 = por %p356, %p357
      %p359 = scmp.ne.s32.totalorder %s345, %s346
      %p360 = scmp.eq.s32.totalorder %s34, 1
      %p361 = por %p359, %p360
      %p363 = scmp.ne.s32.totalorder %s346, %s362
      %p364 = scmp.eq.s32.totalorder %s34, 0
      %p365 = por %p363, %p364
      %p366 = scmp.le.s32.totalorder 1, %s28
      %p367 = scmp.lt.s32.totalorder %s28, 3
      %p368 = pnand %p366, %p367
      %p369 = pneg %p368
      // Predicated region
      $region9: #{tpu_custom_call.1} parent=5 // pred_check
        _
      $region10: #{tpu_custom_call.1} parent=5 // pred_check_branch
        %371 = sbr.rel (%p368) target = $region12
      $region11: #{tpu_custom_call.1} parent=5 // pred_region
        %s372 = ssub.s32 %s28, 1
        // Predicated region
        $region13: #{tpu_custom_call.1} parent=11 // pred_check
          %p373 = pneg %p101
        $region14: #{tpu_custom_call.1} parent=11 // pred_check_branch
          %375 = sbr.rel (%p373) target = $region16
        $region15: #{tpu_custom_call.1} parent=11 // pred_region
          %s377 = ssub.s32 64, 64
          %378 = vsyncadd [#allocation6], %s377
          %s380 = sshll.u32 [#allocation5], 4
          %s381 = int_to_ptr.vmem [resolvable:$true] %s380
          %383 = dma.hbm_to_vmem [thread:$0]  %s2, 64, %s381, [#allocation6]
        $region16: #{tpu_custom_call.1} parent=11 // pred_fallthru
          _
        // Predicated region
        $region17: #{tpu_custom_call.1} parent=11 // pred_check
          %p384 = pneg %p122
        $region18: #{tpu_custom_call.1} parent=11 // pred_check_branch
          %386 = sbr.rel (%p384) target = $region20
        $region19: #{tpu_custom_call.1} parent=11 // pred_region
          _
        $region20: #{tpu_custom_call.1} parent=11 // pred_fallthru
          _
        // Predicated region
        $region21: #{tpu_custom_call.1} parent=11 // pred_check
          %p387 = pneg %p143
        $region22: #{tpu_custom_call.1} parent=11 // pred_check_branch
          %389 = sbr.rel (%p387) target = $region24
        $region23: #{tpu_custom_call.1} parent=11 // pred_region
          %s391 = ssub.s32 16, 16
          %392 = vsyncadd [#allocation6], %s391
          %s394 = sshll.u32 [#allocation7], 4
          %s395 = int_to_ptr.vmem [resolvable:$true] %s394
          %397 = dma.hbm_to_vmem [thread:$0]  %s4, 16, %s395, [#allocation6]
        $region24: #{tpu_custom_call.1} parent=11 // pred_fallthru
          _
        // Predicated region
        $region25: #{tpu_custom_call.1} parent=11 // pred_check
          %p398 = pneg %p164
        $region26: #{tpu_custom_call.1} parent=11 // pred_check_branch
          %400 = sbr.rel (%p398) target = $region28
        $region27: #{tpu_custom_call.1} parent=11 // pred_region
          %s402 = ssub.s32 16, 16
          %403 = vsyncadd [#allocation9], %s402
          %s405 = sshll.u32 [#allocation8], 4
          %s406 = int_to_ptr.vmem [resolvable:$true] %s405
          %408 = dma.hbm_to_vmem [thread:$0]  %s5, 16, %s406, [#allocation9]
        $region28: #{tpu_custom_call.1} parent=11 // pred_fallthru
          _
        // Predicated region
        $region29: #{tpu_custom_call.1} parent=11 // pred_check
          %p409 = pneg %p185
        $region30: #{tpu_custom_call.1} parent=11 // pred_check_branch
          %411 = sbr.rel (%p409) target = $region32
        $region31: #{tpu_custom_call.1} parent=11 // pred_region
          _
        $region32: #{tpu_custom_call.1} parent=11 // pred_fallthru
          _
        // Predicated region
        $region33: #{tpu_custom_call.1} parent=11 // pred_check
          %p412 = pneg %p206
        $region34: #{tpu_custom_call.1} parent=11 // pred_check_branch
          %414 = sbr.rel (%p412) target = $region36
        $region35: #{tpu_custom_call.1} parent=11 // pred_region
          _
        $region36: #{tpu_custom_call.1} parent=11 // pred_fallthru
          _
        // Predicated region
        $region37: #{tpu_custom_call.1} parent=11 // pred_check
          %p415 = pneg %p227
        $region38: #{tpu_custom_call.1} parent=11 // pred_check_branch
          %417 = sbr.rel (%p415) target = $region40
        $region39: #{tpu_custom_call.1} parent=11 // pred_region
          _
        $region40: #{tpu_custom_call.1} parent=11 // pred_fallthru
          _
        // Predicated region
        $region41: #{tpu_custom_call.1} parent=11 // pred_check
          %p418 = pneg %p248
        $region42: #{tpu_custom_call.1} parent=11 // pred_check_branch
          %420 = sbr.rel (%p418) target = $region44
        $region43: #{tpu_custom_call.1} parent=11 // pred_region
          _
        $region44: #{tpu_custom_call.1} parent=11 // pred_fallthru
          _
        // Predicated region
        $region45: #{tpu_custom_call.1} parent=11 // pred_check
          %p421 = pneg %p269
        $region46: #{tpu_custom_call.1} parent=11 // pred_check_branch
          %423 = sbr.rel (%p421) target = $region48
        $region47: #{tpu_custom_call.1} parent=11 // pred_region
          _
        $region48: #{tpu_custom_call.1} parent=11 // pred_fallthru
          _
        // Predicated region
        $region49: #{tpu_custom_call.1} parent=11 // pred_check
          %p424 = pneg %p290
        $region50: #{tpu_custom_call.1} parent=11 // pred_check_branch
          %426 = sbr.rel (%p424) target = $region52
        $region51: #{tpu_custom_call.1} parent=11 // pred_region
          _
        $region52: #{tpu_custom_call.1} parent=11 // pred_fallthru
          _
        // Predicated region
        $region53: #{tpu_custom_call.1} parent=11 // pred_check
          %p427 = pneg %p311
        $region54: #{tpu_custom_call.1} parent=11 // pred_check_branch
          %429 = sbr.rel (%p427) target = $region56
        $region55: #{tpu_custom_call.1} parent=11 // pred_region
          _
        $region56: #{tpu_custom_call.1} parent=11 // pred_fallthru
          _
        // Predicated region
        $region57: #{tpu_custom_call.1} parent=11 // pred_check
          %p430 = pneg %p332
        $region58: #{tpu_custom_call.1} parent=11 // pred_check_branch
          %432 = sbr.rel (%p430) target = $region60
        $region59: #{tpu_custom_call.1} parent=11 // pred_region
          _
        $region60: #{tpu_custom_call.1} parent=11 // pred_fallthru
          _
      $region12: #{tpu_custom_call.1} parent=5 // pred_fallthru
        _
      %p433 = scmp.lt.s32.totalorder %s28, 2
      // Predicated region
      $region61: #{tpu_custom_call.1} parent=5 // pred_check
        %p434 = pneg %p433
      $region62: #{tpu_custom_call.1} parent=5 // pred_check_branch
        %436 = sbr.rel (%p434) target = $region64
      $region63: #{tpu_custom_call.1} parent=5 // pred_region
        // Predicated region
        $region65: #{tpu_custom_call.1} parent=63 // pred_check
          %p437 = pneg %p48
        $region66: #{tpu_custom_call.1} parent=63 // pred_check_branch
          %439 = sbr.rel (%p437) target = $region68
        $region67: #{tpu_custom_call.1} parent=63 // pred_region
          %p440 = scmp.lt.s32.totalorder %s28, 1
          %s441 = scalar_select %p440, %s28, 1
          %s442 = smul.addr %s441, 3
          %s443 = smul.addr %s442, 4
          %s444 = scalar_lea.vmem %s0, %s443
        $region68: #{tpu_custom_call.1} parent=63 // pred_fallthru
          _
        // Predicated region
        $region69: #{tpu_custom_call.1} parent=63 // pred_check
          %p445 = pneg %p74
        $region70: #{tpu_custom_call.1} parent=63 // pred_check_branch
          %447 = sbr.rel (%p445) target = $region72
        $region71: #{tpu_custom_call.1} parent=63 // pred_region
          %s448 = sand.u32 %s64, 1
          %s449 = scalar_lea.sflag [#allocation3], %s448
          %s450 = sand.u32 %s64, 1
          %s451 = smul.addr %s450, 12
          %s452 = scalar_lea.vmem [#allocation2], %s451
          %s454 = ssub.s32 192, 192
          %455 = vsyncadd %s449, %s454
          %s456 = smul.addr %s28, 3
          %s457 = smul.addr %s456, 64
          %s458 = scalar_lea.hbm %s1, %s457
          %s460 = sshll.u32 %s452, 4
          %s461 = int_to_ptr.vmem [resolvable:$true] %s460
          %463 = dma.hbm_to_vmem [thread:$0]  %s458, 192, %s461, %s449
        $region72: #{tpu_custom_call.1} parent=63 // pred_fallthru
          _
      $region64: #{tpu_custom_call.1} parent=5 // pred_fallthru
        _
      %p464 = scmp.le.s32.totalorder 1, %s28
      %p465 = scmp.lt.s32.totalorder %s28, 3
      %p466 = pnand %p464, %p465
      %p467 = pneg %p466
      // Predicated region
      $region73: #{tpu_custom_call.1} parent=5 // pred_check
        _
      $region74: #{tpu_custom_call.1} parent=5 // pred_check_branch
        %469 = sbr.rel (%p466) target = $region76
      $region75: #{tpu_custom_call.1} parent=5 // pred_region
        %s470 = ssub.s32 %s28, 1
        %s471 = sand.u32 %s67, 1
        %s472 = scalar_lea.sflag [#allocation3], %s471
        %s473 = sand.u32 %s67, 1
        %s474 = smul.addr %s473, 12
        %s475 = scalar_lea.vmem [#allocation2], %s474
        // Predicated region
        $region77: #{tpu_custom_call.1} parent=75 // pred_check
          %p476 = pneg %p80
        $region78: #{tpu_custom_call.1} parent=75 // pred_check_branch
          %478 = sbr.rel (%p476) target = $region80
        $region79: #{tpu_custom_call.1} parent=75 // pred_region
          %479 = dma.done %s472, 192
        $region80: #{tpu_custom_call.1} parent=75 // pred_fallthru
          _
        // Predicated region
        $region81: #{tpu_custom_call.1} parent=75 // pred_check
          %p480 = pneg %p101
        $region82: #{tpu_custom_call.1} parent=75 // pred_check_branch
          %482 = sbr.rel (%p480) target = $region84
        $region83: #{tpu_custom_call.1} parent=75 // pred_region
          %483 = dma.done [#allocation6], 64
        $region84: #{tpu_custom_call.1} parent=75 // pred_fallthru
          _
        // Predicated region
        $region85: #{tpu_custom_call.1} parent=75 // pred_check
          %p484 = pneg %p143
        $region86: #{tpu_custom_call.1} parent=75 // pred_check_branch
          %486 = sbr.rel (%p484) target = $region88
        $region87: #{tpu_custom_call.1} parent=75 // pred_region
          %487 = dma.done [#allocation6], 16
        $region88: #{tpu_custom_call.1} parent=75 // pred_fallthru
          _
        // Predicated region
        $region89: #{tpu_custom_call.1} parent=75 // pred_check
          %p488 = pneg %p164
        $region90: #{tpu_custom_call.1} parent=75 // pred_check_branch
          %490 = sbr.rel (%p488) target = $region92
        $region91: #{tpu_custom_call.1} parent=75 // pred_region
          %491 = dma.done [#allocation9], 16
        $region92: #{tpu_custom_call.1} parent=75 // pred_fallthru
          _
        %p492 = scmp.lt.s32.totalorder %s33, 1
        %s493 = scalar_select %p492, %s33, 1
        %s494 = smul.addr %s493, 3
        %s495 = smul.addr %s494, 4
        %s496 = scalar_lea.vmem %s0, %s495
        %p497 = pneg %p54
        %p498 = pneg %p51
        %s499 = sand.u32 %s67, 1
        %s500 = scalar_lea.sflag [#allocation3], %s499
        %s501 = sand.u32 %s67, 1
        %s502 = smul.addr %s501, 12
        %s503 = scalar_lea.vmem [#allocation2], %s502
        %p504 = pneg %p80
        %p505 = pneg %p77
        %p506 = pneg %p101
        %p507 = pneg %p98
        %p508 = pneg %p122
        %p509 = pneg %p119
        %p510 = pneg %p143
        %p511 = pneg %p140
        %p512 = pneg %p164
        %p513 = pneg %p161
        %p514 = pneg %p185
        %p515 = pneg %p182
        %p516 = pneg %p206
        %p517 = pneg %p203
        %p518 = pneg %p227
        %p519 = pneg %p224
        %p520 = pneg %p248
        %p521 = pneg %p245
        %p522 = pneg %p269
        %p523 = pneg %p266
        %p524 = pneg %p290
        %p525 = pneg %p287
        %p526 = pneg %p311
        %p527 = pneg %p308
        %p528 = pneg %p332
        %p529 = pneg %p329
        %p530 = pneg %p358
        %p531 = pneg %p355
        %s532 = sand.u32 %s345, 1
        %s533 = scalar_lea.sflag [#allocation4], %s532
        %s534 = sand.u32 %s345, 1
        %s535 = scalar_lea.vmem [#allocation10], %s534
        %p536 = scmp.lt.s32.totalorder %s33, 1
        %s537 = scalar_select %p536, %s33, 1
        %s538 = smul.addr %s537, 3
        %s539 = smul.addr %s538, 4
        %s540 = scalar_lea.vmem %s0, %s539
        %v541 = vld [vmem:[#allocation5] ss:$2 sm:$0x3]
        %s542 = scalar_lea.vmem [#allocation5], 1
        %v543 = vld [vmem:[%s542] ss:$2 sm:$0x3]
        %v544 = vld [vmem:[%s475] sm:$0xff]
        %v545 = vld [vmem:[%s475 + $0x8] sm:$0xf]
        %v546 = vld [vmem:[%s540] sm:$0xff]
        %v547 = vld [vmem:[%s540 + $0x8] sm:$0xf]
        %v548 = vsub.f32 %v544, %v546
        %v549 = vsub.f32 %v545, %v547
        %v551 = vlaneseq
        %v552 = vshrl.u32 %v551, 7
        %v553 = vsub.s32 0, %v552
        %v554 = vrot.slane %v541, %v553
        %v555 = vlaneseq
        %v556 = vshrl.u32 %v555, 7
        %v557 = vsub.s32 1, %v556
        %v558 = vrot.slane %v541, %v557
        %v559 = vcombine.low %v554, %v558
        %v561 = vmul.f32 %v548, %v559
        %v563 = vlaneseq
        %v564 = vshrl.u32 %v563, 7
        %v565 = vsub.s32 0, %v564
        %v566 = vrot.slane %v543, %v565
        %v567 = vlaneseq
        %v568 = vshrl.u32 %v567, 7
        %v569 = vsub.s32 1, %v568
        %v570 = vrot.slane %v543, %v569
        %v571 = vcombine.low %v566, %v570
        %572 = vrot.lane.b32.xlu0 %v571, 2
        %v573 = vpop.permute.xlu0 %572
        %v574 = vrot.slane %v573, 4
        %vm575 = vcmask 15360
        %v576 = vsel %vm575, %v574, %v573
        %v579 = vmul.f32 %v548, %v576
        %v580 = vmul.f32 %v549, %v574
        %581 = vrot.lane.b32.xlu0 %v559, 16
        %v582 = vpop.permute.xlu0 %581
        %v583 = vrot.slane %v582, 4
        %vm584 = vcmask 130048
        %v585 = vsel %vm584, %v583, %v582
        %v588 = vmul.f32 %v548, %v585
        %v589 = vmul.f32 %v549, %v583
        %590 = vrot.lane.b32.xlu0 %v571, 18
        %v591 = vpop.permute.xlu0 %590
        %v592 = vrot.slane %v591, 4
        %vm593 = vcmask 146432
        %v594 = vsel %vm593, %v592, %v591
        %v597 = vmul.f32 %v548, %v594
        %v598 = vmul.f32 %v549, %v592
        %599 = vrot.lane.b32.xlu0 %v559, 32
        %v600 = vpop.permute.xlu0 %599
        %v601 = vrot.slane %v600, 4
        %vm602 = vcmask 261120
        %v603 = vsel %vm602, %v601, %v600
        %v606 = vmul.f32 %v548, %v603
        %v607 = vmul.f32 %v549, %v601
        %608 = vrot.lane.b32.xlu0 %v571, 34
        %v609 = vpop.permute.xlu0 %608
        %v610 = vrot.slane %v609, 4
        %vm611 = vcmask 277504
        %v612 = vsel %vm611, %v610, %v609
        %v615 = vmul.f32 %v548, %v612
        %v616 = vmul.f32 %v549, %v610
        %v618 = vcombine.high %v561, %v561
        %v622 = vcombine.low %v548, %v548
        %v623 = vcombine.low %v549, %v549
        %624 = vrot.lane.b32.xlu0 %v622, 127
        %v625 = vpop.permute.xlu0 %624
        %626 = vrot.lane.b32.xlu0 %v548, 127
        %v627 = vpop.permute.xlu0 %626
        %628 = vrot.lane.b32.xlu0 %v623, 127
        %v629 = vpop.permute.xlu0 %628
        %vm630 = vcmask 1039360
        %v631 = vsel %vm630, %v625, %v627
        %v632 = vsel %vm630, %v627, %v629
        %v637 = vcombine.high %v579, %v579
        %638 = vrot.lane.b32.xlu0 %v579, 126
        %v639 = vpop.permute.xlu0 %638
        %640 = vrot.lane.b32.xlu0 %v637, 126
        %v641 = vpop.permute.xlu0 %640
        %642 = vrot.lane.b32.xlu0 %v580, 126
        %v643 = vpop.permute.xlu0 %642
        %vm644 = vcmask 1031168
        %v645 = vsel %vm644, %v639, %v641
        %v646 = vsel %vm644, %v641, %v643
        %v651 = vcombine.low %v588, %v588
        %v652 = vcombine.low %v589, %v589
        %653 = vrot.lane.b32.xlu0 %v651, 112
        %v654 = vpop.permute.xlu0 %653
        %655 = vrot.lane.b32.xlu0 %v588, 112
        %v656 = vpop.permute.xlu0 %655
        %657 = vrot.lane.b32.xlu0 %v652, 112
        %v658 = vpop.permute.xlu0 %657
        %vm659 = vcmask 916480
        %v660 = vsel %vm659, %v654, %v656
        %v661 = vsel %vm659, %v656, %v658
        %v664 = vcombine.high %v548, %v548
        %665 = vrot.lane.b32.xlu0 %v548, 111
        %v666 = vpop.permute.xlu0 %665
        %667 = vrot.lane.b32.xlu0 %v664, 111
        %v668 = vpop.permute.xlu0 %667
        %669 = vrot.lane.b32.xlu0 %v549, 111
        %v670 = vpop.permute.xlu0 %669
        %vm671 = vcmask 908288
        %v672 = vsel %vm671, %v666, %v668
        %v673 = vsel %vm671, %v668, %v670
        %v678 = vcombine.low %v597, %v597
        %v679 = vcombine.low %v598, %v598
        %680 = vrot.lane.b32.xlu0 %v678, 110
        %v681 = vpop.permute.xlu0 %680
        %682 = vrot.lane.b32.xlu0 %v597, 110
        %v683 = vpop.permute.xlu0 %682
        %684 = vrot.lane.b32.xlu0 %v679, 110
        %v685 = vpop.permute.xlu0 %684
        %vm686 = vcmask 900096
        %v687 = vsel %vm686, %v681, %v683
        %v688 = vsel %vm686, %v683, %v685
        %v693 = vcombine.high %v606, %v606
        %694 = vrot.lane.b32.xlu0 %v606, 96
        %v695 = vpop.permute.xlu0 %694
        %696 = vrot.lane.b32.xlu0 %v693, 96
        %v697 = vpop.permute.xlu0 %696
        %698 = vrot.lane.b32.xlu0 %v607, 96
        %v699 = vpop.permute.xlu0 %698
        %vm700 = vcmask 785408
        %v701 = vsel %vm700, %v695, %v697
        %v702 = vsel %vm700, %v697, %v699
        %705 = vrot.lane.b32.xlu0 %v622, 95
        %v706 = vpop.permute.xlu0 %705
        %707 = vrot.lane.b32.xlu0 %v548, 95
        %v708 = vpop.permute.xlu0 %707
        %709 = vrot.lane.b32.xlu0 %v623, 95
        %v710 = vpop.permute.xlu0 %709
        %vm711 = vcmask 777216
        %v712 = vsel %vm711, %v706, %v708
        %v713 = vsel %vm711, %v708, %v710
        %v718 = vcombine.high %v615, %v615
        %719 = vrot.lane.b32.xlu0 %v615, 94
        %v720 = vpop.permute.xlu0 %719
        %721 = vrot.lane.b32.xlu0 %v718, 94
        %v722 = vpop.permute.xlu0 %721
        %723 = vrot.lane.b32.xlu0 %v616, 94
        %v724 = vpop.permute.xlu0 %723
        %vm725 = vcmask 769024
        %v726 = vsel %vm725, %v720, %v722
        %v727 = vsel %vm725, %v722, %v724
        %vm728 = vcmask 1043456
        %v729 = vsel %vm728, %v561, %v631
        %v730 = vsel %vm728, %v618, %v632
        %v731 = vsel %vm728, %v645, %v660
        %v732 = vsel %vm728, %v646, %v661
        %v733 = vsel %vm728, %v672, %v687
        %v734 = vsel %vm728, %v673, %v688
        %v735 = vsel %vm728, %v701, %v712
        %v736 = vsel %vm728, %v702, %v713
        %v737 = vld [vmem:[#allocation7] sm:$0x1]
        %v738 = vmul.f32 %v544, %v559
        %v739 = vmul.f32 %v544, %v576
        %v740 = vmul.f32 %v545, %v574
        %v741 = vmul.f32 %v544, %v585
        %v742 = vmul.f32 %v545, %v583
        %v743 = vmul.f32 %v544, %v594
        %v744 = vmul.f32 %v545, %v592
        %v745 = vmul.f32 %v544, %v603
        %v746 = vmul.f32 %v545, %v601
        %v747 = vmul.f32 %v544, %v612
        %v748 = vmul.f32 %v545, %v610
        %v750 = vcombine.high %v738, %v738
        %v754 = vcombine.low %v544, %v544
        %v755 = vcombine.low %v545, %v545
        %756 = vrot.lane.b32.xlu0 %v754, 127
        %v757 = vpop.permute.xlu0 %756
        %758 = vrot.lane.b32.xlu0 %v544, 127
        %v759 = vpop.permute.xlu0 %758
        %760 = vrot.lane.b32.xlu0 %v755, 127
        %v761 = vpop.permute.xlu0 %760
        %v762 = vsel %vm630, %v757, %v759
        %v763 = vsel %vm630, %v759, %v761
        %v768 = vcombine.high %v739, %v739
        %769 = vrot.lane.b32.xlu0 %v739, 126
        %v770 = vpop.permute.xlu0 %769
        %771 = vrot.lane.b32.xlu0 %v768, 126
        %v772 = vpop.permute.xlu0 %771
        %773 = vrot.lane.b32.xlu0 %v740, 126
        %v774 = vpop.permute.xlu0 %773
        %v775 = vsel %vm644, %v770, %v772
        %v776 = vsel %vm644, %v772, %v774
        %v781 = vcombine.low %v741, %v741
        %v782 = vcombine.low %v742, %v742
        %783 = vrot.lane.b32.xlu0 %v781, 112
        %v784 = vpop.permute.xlu0 %783
        %785 = vrot.lane.b32.xlu0 %v741, 112
        %v786 = vpop.permute.xlu0 %785
        %787 = vrot.lane.b32.xlu0 %v782, 112
        %v788 = vpop.permute.xlu0 %787
        %v789 = vsel %vm659, %v784, %v786
        %v790 = vsel %vm659, %v786, %v788
        %v793 = vcombine.high %v544, %v544
        %794 = vrot.lane.b32.xlu0 %v544, 111
        %v795 = vpop.permute.xlu0 %794
        %796 = vrot.lane.b32.xlu0 %v793, 111
        %v797 = vpop.permute.xlu0 %796
        %798 = vrot.lane.b32.xlu0 %v545, 111
        %v799 = vpop.permute.xlu0 %798
        %v800 = vsel %vm671, %v795, %v797
        %v801 = vsel %vm671, %v797, %v799
        %v806 = vcombine.low %v743, %v743
        %v807 = vcombine.low %v744, %v744
        %808 = vrot.lane.b32.xlu0 %v806, 110
        %v809 = vpop.permute.xlu0 %808
        %810 = vrot.lane.b32.xlu0 %v743, 110
        %v811 = vpop.permute.xlu0 %810
        %812 = vrot.lane.b32.xlu0 %v807, 110
        %v813 = vpop.permute.xlu0 %812
        %v814 = vsel %vm686, %v809, %v811
        %v815 = vsel %vm686, %v811, %v813
        %v820 = vcombine.high %v745, %v745
        %821 = vrot.lane.b32.xlu0 %v745, 96
        %v822 = vpop.permute.xlu0 %821
        %823 = vrot.lane.b32.xlu0 %v820, 96
        %v824 = vpop.permute.xlu0 %823
        %825 = vrot.lane.b32.xlu0 %v746, 96
        %v826 = vpop.permute.xlu0 %825
        %v827 = vsel %vm700, %v822, %v824
        %v828 = vsel %vm700, %v824, %v826
        %831 = vrot.lane.b32.xlu0 %v754, 95
        %v832 = vpop.permute.xlu0 %831
        %833 = vrot.lane.b32.xlu0 %v544, 95
        %v834 = vpop.permute.xlu0 %833
        %835 = vrot.lane.b32.xlu0 %v755, 95
        %v836 = vpop.permute.xlu0 %835
        %v837 = vsel %vm711, %v832, %v834
        %v838 = vsel %vm711, %v834, %v836
        %v843 = vcombine.high %v747, %v747
        %844 = vrot.lane.b32.xlu0 %v747, 94
        %v845 = vpop.permute.xlu0 %844
        %846 = vrot.lane.b32.xlu0 %v843, 94
        %v847 = vpop.permute.xlu0 %846
        %848 = vrot.lane.b32.xlu0 %v748, 94
        %v849 = vpop.permute.xlu0 %848
        %v850 = vsel %vm725, %v845, %v847
        %v851 = vsel %vm725, %v847, %v849
        %v854 = vsel %vm728, %v738, %v762
        %v855 = vsel %vm728, %v750, %v763
        %v856 = vsel %vm728, %v775, %v789
        %v857 = vsel %vm728, %v776, %v790
        %v858 = vsel %vm728, %v800, %v814
        %v859 = vsel %vm728, %v801, %v815
        %v860 = vsel %vm728, %v827, %v837
        %v861 = vsel %vm728, %v828, %v838
        %v862 = vld [vmem:[#allocation8] sm:$0x1]
        %vm863 = vcmask 293888
        %v865 = vsel %vm863, %v862, 0
        %v867 = vsel %vm728, %v850, 0
        %v869 = vsel %vm728, %v851, 0
        %871 = vmatprep.subr.mxu0 0.0
        %872 = vmatpush1.msra.mxu0 0.0
        %873 = vmatprep.subr.mxu0 0.0
        %874 = vmatpush1.msra.mxu0 0.0
        %875 = vmatprep.subr.mxu0 0.0
        %876 = vmatpush1.msra.mxu0 0.0
        %877 = vmatprep.subr.mxu0 0.0
        %878 = vmatpush1.msra.mxu0 0.0
        %879 = vmatprep.subr.mxu0 0.0
        %880 = vmatpush1.msra.mxu0 0.0
        %881 = vmatprep.subr.mxu0 0.0
        %882 = vmatpush1.msra.mxu0 0.0
        %883 = vmatprep.subr.mxu0 0.0
        %884 = vmatpush1.msra.mxu0 0.0
        %885 = vmatprep.subr.mxu0 0.0
        %886 = vmatpush1.msra.mxu0 0.0
        %887 = vmatprep.subr.mxu0 0.0
        %888 = vmatpush1.msra.mxu0 0.0
        %889 = vmatprep.subr.mxu0 0.0
        %890 = vmatpush1.msra.mxu0 0.0
        %891 = vmatprep.subr.mxu0 0.0
        %892 = vmatpush1.msra.mxu0 0.0
        %893 = vmatprep.subr.mxu0 %v869
        %894 = vmatpush1.msra.mxu0 %v867
        %895 = vmatprep.subr.mxu0 %v861
        %896 = vmatpush1.msra.mxu0 %v860
        %897 = vmatprep.subr.mxu0 %v859
        %898 = vmatpush1.msra.mxu0 %v858
        %899 = vmatprep.subr.mxu0 %v857
        %900 = vmatpush1.msra.mxu0 %v856
        %901 = vmatprep.subr.mxu0 %v855
        %902 = vmatpush1.msra.mxu0 %v854
        %903 = vmatprep.subr.mxu0 0.0
        %904 = vmatpush2.msra.mxu0 0.0
        %905 = vmatprep.subr.mxu0 0.0
        %906 = vmatpush2.msra.mxu0 0.0
        %907 = vmatprep.subr.mxu0 0.0
        %908 = vmatpush2.msra.mxu0 0.0
        %909 = vmatprep.subr.mxu0 0.0
        %910 = vmatpush2.msra.mxu0 0.0
        %911 = vmatprep.subr.mxu0 0.0
        %912 = vmatpush2.msra.mxu0 0.0
        %913 = vmatprep.subr.mxu0 0.0
        %914 = vmatpush2.msra.mxu0 0.0
        %915 = vmatprep.subr.mxu0 0.0
        %916 = vmatpush2.msra.mxu0 0.0
        %917 = vmatprep.subr.mxu0 0.0
        %918 = vmatpush2.msra.mxu0 0.0
        %919 = vmatprep.subr.mxu0 0.0
        %920 = vmatpush2.msra.mxu0 0.0
        %921 = vmatprep.subr.mxu0 0.0
        %922 = vmatpush2.msra.mxu0 0.0
        %923 = vmatprep.subr.mxu0 0.0
        %924 = vmatpush2.msra.mxu0 0.0
        %925 = vmatprep.subr.mxu0 0.0
        %926 = vmatpush2.msra.mxu0 0.0
        %927 = vmatprep.subr.mxu0 0.0
        %928 = vmatpush2.msra.mxu0 0.0
        %929 = vmatprep.subr.mxu0 0.0
        %930 = vmatpush2.msra.mxu0 0.0
        %931 = vmatprep.subr.mxu0 0.0
        %932 = vmatpush2.msra.mxu0 0.0
        %933 = vmatprep.subr.mxu0 0.0
        %934 = vmatpush2.msra.mxu0 0.0
        %935 = vmatprep.mubr.f32.mxu0 0.0
        %936 = vmatmul.mubr.f32.gmra.mxu0 %v865
        %v937 = vpop.f32.mrf.mxu0
        %v938 = vadd.f32 0.0, %v937
        %v939 = vpop.f32.mrf.mxu0
        %v940 = vadd.f32 0.0, %v939
        %941 = vdwg.mxu0
        %v943 = vsel %vm863, %v737, 0
        %v945 = vsel %vm728, %v726, 0
        %v947 = vsel %vm728, %v727, 0
        %949 = vmatprep.subr.mxu0 0.0
        %950 = vmatpush1.msra.mxu0 0.0
        %951 = vmatprep.subr.mxu0 0.0
        %952 = vmatpush1.msra.mxu0 0.0
        %953 = vmatprep.subr.mxu0 0.0
        %954 = vmatpush1.msra.mxu0 0.0
        %955 = vmatprep.subr.mxu0 0.0
        %956 = vmatpush1.msra.mxu0 0.0
        %957 = vmatprep.subr.mxu0 0.0
        %958 = vmatpush1.msra.mxu0 0.0
        %959 = vmatprep.subr.mxu0 0.0
        %960 = vmatpush1.msra.mxu0 0.0
        %961 = vmatprep.subr.mxu0 0.0
        %962 = vmatpush1.msra.mxu0 0.0
        %963 = vmatprep.subr.mxu0 0.0
        %964 = vmatpush1.msra.mxu0 0.0
        %965 = vmatprep.subr.mxu0 0.0
        %966 = vmatpush1.msra.mxu0 0.0
        %967 = vmatprep.subr.mxu0 0.0
        %968 = vmatpush1.msra.mxu0 0.0
        %969 = vmatprep.subr.mxu0 0.0
        %970 = vmatpush1.msra.mxu0 0.0
        %971 = vmatprep.subr.mxu0 %v947
        %972 = vmatpush1.msra.mxu0 %v945
        %973 = vmatprep.subr.mxu0 %v736
        %974 = vmatpush1.msra.mxu0 %v735
        %975 = vmatprep.subr.mxu0 %v734
        %976 = vmatpush1.msra.mxu0 %v733
        %977 = vmatprep.subr.mxu0 %v732
        %978 = vmatpush1.msra.mxu0 %v731
        %979 = vmatprep.subr.mxu0 %v730
        %980 = vmatpush1.msra.mxu0 %v729
        %981 = vmatprep.subr.mxu0 0.0
        %982 = vmatpush2.msra.mxu0 0.0
        %983 = vmatprep.subr.mxu0 0.0
        %984 = vmatpush2.msra.mxu0 0.0
        %985 = vmatprep.subr.mxu0 0.0
        %986 = vmatpush2.msra.mxu0 0.0
        %987 = vmatprep.subr.mxu0 0.0
        %988 = vmatpush2.msra.mxu0 0.0
        %989 = vmatprep.subr.mxu0 0.0
        %990 = vmatpush2.msra.mxu0 0.0
        %991 = vmatprep.subr.mxu0 0.0
        %992 = vmatpush2.msra.mxu0 0.0
        %993 = vmatprep.subr.mxu0 0.0
        %994 = vmatpush2.msra.mxu0 0.0
        %995 = vmatprep.subr.mxu0 0.0
        %996 = vmatpush2.msra.mxu0 0.0
        %997 = vmatprep.subr.mxu0 0.0
        %998 = vmatpush2.msra.mxu0 0.0
        %999 = vmatprep.subr.mxu0 0.0
        %1000 = vmatpush2.msra.mxu0 0.0
        %1001 = vmatprep.subr.mxu0 0.0
        %1002 = vmatpush2.msra.mxu0 0.0
        %1003 = vmatprep.subr.mxu0 0.0
        %1004 = vmatpush2.msra.mxu0 0.0
        %1005 = vmatprep.subr.mxu0 0.0
        %1006 = vmatpush2.msra.mxu0 0.0
        %1007 = vmatprep.subr.mxu0 0.0
        %1008 = vmatpush2.msra.mxu0 0.0
        %1009 = vmatprep.subr.mxu0 0.0
        %1010 = vmatpush2.msra.mxu0 0.0
        %1011 = vmatprep.subr.mxu0 0.0
        %1012 = vmatpush2.msra.mxu0 0.0
        %1013 = vmatprep.mubr.f32.mxu0 0.0
        %1014 = vmatmul.mubr.f32.gmra.mxu0 %v943
        %v1015 = vpop.f32.mrf.mxu0
        %v1016 = vadd.f32 %v938, %v1015
        %v1017 = vpop.f32.mrf.mxu0
        %v1018 = vadd.f32 %v940, %v1017
        %1019 = vdwg.mxu0
        %v1020 = vxor.u32 %v1016, 2147483648
        %v1021 = vxor.u32 %v1018, 2147483648
        %v1022 = vmul.f32 %v1020, 1.442695
        %v1023 = vpow.pop %v1022
        %v1024 = vmul.f32 %v1021, 1.442695
        %v1025 = vpow.pop %v1024
        %v1026 = vadd.f32 %v1023, 1.0
        %v1027 = vadd.f32 %v1025, 1.0
        %v1028 = vrcp.pop %v1026
        %v1029 = vmul.f32 1.0, %v1028
        %v1030 = vrcp.pop %v1027
        %v1031 = vmul.f32 1.0, %v1030
        %1034 = vrot.lane.b32.xlu0 %v1029, 17
        %v1035 = vpop.permute.xlu0 %1034
        %1036 = vrot.lane.b32.xlu0 %v1031, 17
        %v1037 = vpop.permute.xlu0 %1036
        %vm1038 = vcmask 138240
        %v1039 = vsel %vm1038, %v1035, %v1037
        %v1043 = vsel %vm1038, 0.0, %v1035
        %v1044 = vsel %vm1038, %v1037, 0.0
        %v1045 = vlaneseq
        %v1046 = vshrl.u32 %v1045, 7
        %v1047 = vsub.s32 0, %v1046
        %v1048 = vrot.slane %v1043, %v1047
        %v1049 = vlaneseq
        %v1050 = vshrl.u32 %v1049, 7
        %v1051 = vsub.s32 0, %v1050
        %v1052 = vrot.slane %v1039, %v1051
        %v1053 = vlaneseq
        %v1054 = vshrl.u32 %v1053, 7
        %v1055 = vsub.s32 0, %v1054
        %v1056 = vrot.slane %v1044, %v1055
        %1060 = vrot.lane.b32.xlu0 %v1048, 127
        %v1061 = vpop.permute.xlu0 %1060
        %1062 = vrot.lane.b32.xlu0 %v1052, 127
        %v1063 = vpop.permute.xlu0 %1062
        %1064 = vrot.lane.b32.xlu0 %v1056, 127
        %v1065 = vpop.permute.xlu0 %1064
        %v1066 = vsel %vm630, %v1061, %v1063
        %v1067 = vsel %vm630, %v1063, %v1065
        %1070 = vrot.lane.b32.xlu0 %v1048, 126
        %v1071 = vpop.permute.xlu0 %1070
        %1072 = vrot.lane.b32.xlu0 %v1052, 126
        %v1073 = vpop.permute.xlu0 %1072
        %1074 = vrot.lane.b32.xlu0 %v1056, 126
        %v1075 = vpop.permute.xlu0 %1074
        %v1076 = vsel %vm644, %v1071, %v1073
        %v1077 = vsel %vm644, %v1073, %v1075
        %1080 = vrot.lane.b32.xlu0 %v1048, 112
        %v1081 = vpop.permute.xlu0 %1080
        %1082 = vrot.lane.b32.xlu0 %v1052, 112
        %v1083 = vpop.permute.xlu0 %1082
        %1084 = vrot.lane.b32.xlu0 %v1056, 112
        %v1085 = vpop.permute.xlu0 %1084
        %v1086 = vsel %vm659, %v1081, %v1083
        %v1087 = vsel %vm659, %v1083, %v1085
        %1090 = vrot.lane.b32.xlu0 %v1048, 111
        %v1091 = vpop.permute.xlu0 %1090
        %1092 = vrot.lane.b32.xlu0 %v1052, 111
        %v1093 = vpop.permute.xlu0 %1092
        %1094 = vrot.lane.b32.xlu0 %v1056, 111
        %v1095 = vpop.permute.xlu0 %1094
        %v1096 = vsel %vm671, %v1091, %v1093
        %v1097 = vsel %vm671, %v1093, %v1095
        %1100 = vrot.lane.b32.xlu0 %v1048, 110
        %v1101 = vpop.permute.xlu0 %1100
        %1102 = vrot.lane.b32.xlu0 %v1052, 110
        %v1103 = vpop.permute.xlu0 %1102
        %1104 = vrot.lane.b32.xlu0 %v1056, 110
        %v1105 = vpop.permute.xlu0 %1104
        %v1106 = vsel %vm686, %v1101, %v1103
        %v1107 = vsel %vm686, %v1103, %v1105
        %1110 = vrot.lane.b32.xlu0 %v1048, 96
        %v1111 = vpop.permute.xlu0 %1110
        %1112 = vrot.lane.b32.xlu0 %v1052, 96
        %v1113 = vpop.permute.xlu0 %1112
        %1114 = vrot.lane.b32.xlu0 %v1056, 96
        %v1115 = vpop.permute.xlu0 %1114
        %v1116 = vsel %vm700, %v1111, %v1113
        %v1117 = vsel %vm700, %v1113, %v1115
        %1120 = vrot.lane.b32.xlu0 %v1048, 95
        %v1121 = vpop.permute.xlu0 %1120
        %1122 = vrot.lane.b32.xlu0 %v1052, 95
        %v1123 = vpop.permute.xlu0 %1122
        %1124 = vrot.lane.b32.xlu0 %v1056, 95
        %v1125 = vpop.permute.xlu0 %1124
        %v1126 = vsel %vm711, %v1121, %v1123
        %v1127 = vsel %vm711, %v1123, %v1125
        %1130 = vrot.lane.b32.xlu0 %v1048, 94
        %v1131 = vpop.permute.xlu0 %1130
        %1132 = vrot.lane.b32.xlu0 %v1052, 94
        %v1133 = vpop.permute.xlu0 %1132
        %1134 = vrot.lane.b32.xlu0 %v1056, 94
        %v1135 = vpop.permute.xlu0 %1134
        %v1136 = vsel %vm725, %v1131, %v1133
        %v1137 = vsel %vm725, %v1133, %v1135
        %v1140 = vsel %vm728, %v1048, %v1066
        %v1141 = vsel %vm728, %v1052, %v1067
        %v1142 = vsel %vm728, %v1076, %v1086
        %v1143 = vsel %vm728, %v1077, %v1087
        %v1144 = vsel %vm728, %v1096, %v1106
        %v1145 = vsel %vm728, %v1097, %v1107
        %v1146 = vsel %vm728, %v1116, %v1126
        %v1147 = vsel %vm728, %v1117, %v1127
        %v1148 = vld [vmem:[%s6] sm:$0xff]
        %v1149 = vmul.f32 %v1140, %v854
        %v1150 = vmul.f32 %v1141, %v855
        %v1151 = vmul.f32 %v1142, %v856
        %v1152 = vmul.f32 %v1143, %v857
        %v1153 = vmul.f32 %v1144, %v858
        %v1154 = vmul.f32 %v1145, %v859
        %v1155 = vmul.f32 %v1146, %v860
        %v1156 = vmul.f32 %v1147, %v861
        %v1157 = vmul.f32 %v1136, %v850
        %v1158 = vmul.f32 %v1137, %v851
        %v1160 = vsel %vm863, %v1148, 0
        %v1163 = vsel %vm728, %v1157, 0
        %v1166 = vsel %vm728, %v1158, 0
        %1168 = vmatprep.subr.mxu0 0.0
        %1169 = vmatpush1.msra.mxu0 0.0
        %1170 = vmatprep.subr.mxu0 0.0
        %1171 = vmatpush1.msra.mxu0 0.0
        %1172 = vmatprep.subr.mxu0 0.0
        %1173 = vmatpush1.msra.mxu0 0.0
        %1174 = vmatprep.subr.mxu0 0.0
        %1175 = vmatpush1.msra.mxu0 0.0
        %1176 = vmatprep.subr.mxu0 0.0
        %1177 = vmatpush1.msra.mxu0 0.0
        %1178 = vmatprep.subr.mxu0 0.0
        %1179 = vmatpush1.msra.mxu0 0.0
        %1180 = vmatprep.subr.mxu0 0.0
        %1181 = vmatpush1.msra.mxu0 0.0
        %1182 = vmatprep.subr.mxu0 0.0
        %1183 = vmatpush1.msra.mxu0 0.0
        %1184 = vmatprep.subr.mxu0 0.0
        %1185 = vmatpush1.msra.mxu0 0.0
        %1186 = vmatprep.subr.mxu0 0.0
        %1187 = vmatpush1.msra.mxu0 0.0
        %1188 = vmatprep.subr.mxu0 0.0
        %1189 = vmatpush1.msra.mxu0 0.0
        %1190 = vmatprep.subr.mxu0 %v1166
        %1191 = vmatpush1.msra.mxu0 %v1163
        %1192 = vmatprep.subr.mxu0 %v1156
        %1193 = vmatpush1.msra.mxu0 %v1155
        %1194 = vmatprep.subr.mxu0 %v1154
        %1195 = vmatpush1.msra.mxu0 %v1153
        %1196 = vmatprep.subr.mxu0 %v1152
        %1197 = vmatpush1.msra.mxu0 %v1151
        %1198 = vmatprep.subr.mxu0 %v1150
        %1199 = vmatpush1.msra.mxu0 %v1149
        %1200 = vmatprep.subr.mxu0 0.0
        %1201 = vmatpush2.msra.mxu0 0.0
        %1202 = vmatprep.subr.mxu0 0.0
        %1203 = vmatpush2.msra.mxu0 0.0
        %1204 = vmatprep.subr.mxu0 0.0
        %1205 = vmatpush2.msra.mxu0 0.0
        %1206 = vmatprep.subr.mxu0 0.0
        %1207 = vmatpush2.msra.mxu0 0.0
        %1208 = vmatprep.subr.mxu0 0.0
        %1209 = vmatpush2.msra.mxu0 0.0
        %1210 = vmatprep.subr.mxu0 0.0
        %1211 = vmatpush2.msra.mxu0 0.0
        %1212 = vmatprep.subr.mxu0 0.0
        %1213 = vmatpush2.msra.mxu0 0.0
        %1214 = vmatprep.subr.mxu0 0.0
        %1215 = vmatpush2.msra.mxu0 0.0
        %1216 = vmatprep.subr.mxu0 0.0
        %1217 = vmatpush2.msra.mxu0 0.0
        %1218 = vmatprep.subr.mxu0 0.0
        %1219 = vmatpush2.msra.mxu0 0.0
        %1220 = vmatprep.subr.mxu0 0.0
        %1221 = vmatpush2.msra.mxu0 0.0
        %1222 = vmatprep.subr.mxu0 0.0
        %1223 = vmatpush2.msra.mxu0 0.0
        %1224 = vmatprep.subr.mxu0 0.0
        %1225 = vmatpush2.msra.mxu0 0.0
        %1226 = vmatprep.subr.mxu0 0.0
        %1227 = vmatpush2.msra.mxu0 0.0
        %1228 = vmatprep.subr.mxu0 0.0
        %1229 = vmatpush2.msra.mxu0 0.0
        %1230 = vmatprep.subr.mxu0 0.0
        %1231 = vmatpush2.msra.mxu0 0.0
        %1232 = vmatprep.mubr.f32.mxu0 0.0
        %1233 = vmatmul.mubr.f32.gmra.mxu0 %v1160
        %v1234 = vpop.f32.mrf.mxu0
        %v1235 = vadd.f32 0.0, %v1234
        %v1236 = vpop.f32.mrf.mxu0
        %v1237 = vadd.f32 0.0, %v1236
        %1238 = vdwg.mxu0
        %v1239 = vld [vmem:[%s8] sm:$0xff]
        %1241 = vset.pattern.permute.xlu0 0
        %1242 = vperm.xlu0 %1241, %v1239
        %v1243 = vpop.permute.xlu0 %1242
        %v1245 = vmul.f32 %v1235, %v1243
        %v1246 = vmul.f32 %v1237, %v1243
        %v1247 = vld [vmem:[%s9] sm:$0xff]
        %1249 = vset.pattern.permute.xlu0 0
        %1250 = vperm.xlu0 %1249, %v1247
        %v1251 = vpop.permute.xlu0 %1250
        %v1253 = vadd.f32 %v1245, %v1251
        %v1254 = vadd.f32 %v1246, %v1251
        %v1255 = vmax.f32 %v1253, 0.0
        %v1256 = vmax.f32 %v1254, 0.0
        %1259 = vrot.lane.b32.xlu0 %v1255, 112
        %v1260 = vpop.permute.xlu0 %1259
        %1261 = vrot.lane.b32.xlu0 %v1256, 112
        %v1262 = vpop.permute.xlu0 %1261
        %v1263 = vsel %vm659, %v1260, %v1262
        %v1266 = vmax.f32 %v1255, %v1263
        %v1267 = vmax.f32 %v1256, %v1262
        %1268 = vrot.lane.b32.xlu0 %v1255, 96
        %v1269 = vpop.permute.xlu0 %1268
        %1270 = vrot.lane.b32.xlu0 %v1256, 96
        %v1271 = vpop.permute.xlu0 %1270
        %v1272 = vsel %vm700, %v1269, %v1271
        %v1275 = vmax.f32 %v1266, %v1272
        %v1276 = vmax.f32 %v1267, %v1271
        %1279 = vrot.lane.b32.xlu0 %v1275, 127
        %v1280 = vpop.permute.xlu0 %1279
        %1281 = vrot.lane.b32.xlu0 %v1276, 127
        %v1282 = vpop.permute.xlu0 %1281
        %v1283 = vsel %vm630, %v1280, %v1282
        %v1286 = vmax.f32 %v1275, %v1283
        %v1287 = vmax.f32 %v1276, %v1282
        %1288 = vrot.lane.b32.xlu0 %v1275, 126
        %v1289 = vpop.permute.xlu0 %1288
        %1290 = vrot.lane.b32.xlu0 %v1276, 126
        %v1291 = vpop.permute.xlu0 %1290
        %v1292 = vsel %vm644, %v1289, %v1291
        %v1295 = vmax.f32 %v1286, %v1292
        %v1296 = vmax.f32 %v1287, %v1291
        %1299 = vrot.lane.b32.xlu0 %v1295, 51
        %v1300 = vpop.permute.xlu0 %1299
        %1301 = vrot.lane.b32.xlu0 %v1296, 51
        %v1302 = vpop.permute.xlu0 %1301
        %vm1303 = vcmask 416768
        %v1304 = vsel %vm1303, %v1300, %v1302
        %v1308 = vsel %vm1303, 0.0, %v1300
        %v1309 = vsel %vm1038, %v1302, 0.0
        %v1310 = vld [vmem:[%s3] ss:$4 sm:$0x3]
        %s1311 = scalar_lea.vmem %s3, 1
        %v1312 = vld [vmem:[%s1311] ss:$4 sm:$0x3]
        %s1313 = scalar_lea.vmem %s3, 2
        %v1314 = vld [vmem:[%s1313] ss:$4 sm:$0x3]
        %v1316 = vlaneseq
        %v1317 = vshrl.u32 %v1316, 7
        %v1318 = vsub.s32 0, %v1317
        %v1319 = vrot.slane %v1310, %v1318
        %v1320 = vlaneseq
        %v1321 = vshrl.u32 %v1320, 7
        %v1322 = vsub.s32 1, %v1321
        %v1323 = vrot.slane %v1310, %v1322
        %v1326 = vmul.f32 %v1308, %v1319
        %v1327 = vmul.f32 %v1304, %v1323
        %v1329 = vlaneseq
        %v1330 = vshrl.u32 %v1329, 7
        %v1331 = vsub.s32 0, %v1330
        %v1332 = vrot.slane %v1312, %v1331
        %v1333 = vlaneseq
        %v1334 = vshrl.u32 %v1333, 7
        %v1335 = vsub.s32 1, %v1334
        %v1336 = vrot.slane %v1312, %v1335
        %1337 = vrot.lane.b32.xlu0 %v1332, 6
        %v1338 = vpop.permute.xlu0 %1337
        %1339 = vrot.lane.b32.xlu0 %v1336, 6
        %v1340 = vpop.permute.xlu0 %1339
        %vm1341 = vcmask 48128
        %v1342 = vsel %vm1341, %v1338, %v1340
        %v1345 = vmul.f32 %v1308, %v1338
        %v1346 = vmul.f32 %v1304, %v1342
        %1347 = vrot.lane.b32.xlu0 %v1319, 48
        %v1348 = vpop.permute.xlu0 %1347
        %1349 = vrot.lane.b32.xlu0 %v1323, 48
        %v1350 = vpop.permute.xlu0 %1349
        %vm1351 = vcmask 392192
        %v1352 = vsel %vm1351, %v1348, %v1350
        %v1355 = vmul.f32 %v1308, %v1348
        %v1356 = vmul.f32 %v1304, %v1352
        %1357 = vrot.lane.b32.xlu0 %v1332, 54
        %v1358 = vpop.permute.xlu0 %1357
        %1359 = vrot.lane.b32.xlu0 %v1336, 54
        %v1360 = vpop.permute.xlu0 %1359
        %vm1361 = vcmask 441344
        %v1362 = vsel %vm1361, %v1358, %v1360
        %v1366 = vmul.f32 %v1308, %v1358
        %v1367 = vmul.f32 %v1304, %v1362
        %v1368 = vmul.f32 %v1309, %v1360
        %1369 = vrot.lane.b32.xlu0 %v1319, 96
        %v1370 = vpop.permute.xlu0 %1369
        %1371 = vrot.lane.b32.xlu0 %v1323, 96
        %v1372 = vpop.permute.xlu0 %1371
        %v1373 = vsel %vm700, %v1370, %v1372
        %v1377 = vmul.f32 %v1308, %v1370
        %v1378 = vmul.f32 %v1304, %v1373
        %v1379 = vmul.f32 %v1309, %v1372
        %1380 = vrot.lane.b32.xlu0 %v1332, 102
        %v1381 = vpop.permute.xlu0 %1380
        %1382 = vrot.lane.b32.xlu0 %v1336, 102
        %v1383 = vpop.permute.xlu0 %1382
        %vm1384 = vcmask 834560
        %v1385 = vsel %vm1384, %v1381, %v1383
        %v1389 = vmul.f32 %v1308, %v1381
        %v1390 = vmul.f32 %v1304, %v1385
        %v1391 = vmul.f32 %v1309, %v1383
        %1393 = vrot.lane.b32.xlu0 %v1308, 125
        %v1394 = vpop.permute.xlu0 %1393
        %1395 = vrot.lane.b32.xlu0 %v1304, 125
        %v1396 = vpop.permute.xlu0 %1395
        %vm1397 = vcmask 1022976
        %v1398 = vsel %vm1397, %v1394, %v1396
        %1403 = vrot.lane.b32.xlu0 %v1345, 122
        %v1404 = vpop.permute.xlu0 %1403
        %1405 = vrot.lane.b32.xlu0 %v1346, 122
        %v1406 = vpop.permute.xlu0 %1405
        %vm1407 = vcmask 998400
        %v1408 = vsel %vm1407, %v1404, %v1406
        %1413 = vrot.lane.b32.xlu0 %v1355, 80
        %v1414 = vpop.permute.xlu0 %1413
        %1415 = vrot.lane.b32.xlu0 %v1356, 80
        %v1416 = vpop.permute.xlu0 %1415
        %vm1417 = vcmask 654336
        %v1418 = vsel %vm1417, %v1414, %v1416
        %1421 = vrot.lane.b32.xlu0 %v1308, 77
        %v1422 = vpop.permute.xlu0 %1421
        %1423 = vrot.lane.b32.xlu0 %v1304, 77
        %v1424 = vpop.permute.xlu0 %1423
        %vm1425 = vcmask 629760
        %v1426 = vsel %vm1425, %v1422, %v1424
        %1432 = vrot.lane.b32.xlu0 %v1366, 74
        %v1433 = vpop.permute.xlu0 %1432
        %1434 = vrot.lane.b32.xlu0 %v1367, 74
        %v1435 = vpop.permute.xlu0 %1434
        %1436 = vrot.lane.b32.xlu0 %v1368, 74
        %v1437 = vpop.permute.xlu0 %1436
        %vm1438 = vcmask 605184
        %v1439 = vsel %vm1438, %v1433, %v1435
        %v1440 = vsel %vm1438, %v1435, %v1437
        %1446 = vrot.lane.b32.xlu0 %v1377, 32
        %v1447 = vpop.permute.xlu0 %1446
        %1448 = vrot.lane.b32.xlu0 %v1378, 32
        %v1449 = vpop.permute.xlu0 %1448
        %1450 = vrot.lane.b32.xlu0 %v1379, 32
        %v1451 = vpop.permute.xlu0 %1450
        %v1452 = vsel %vm602, %v1447, %v1449
        %v1453 = vsel %vm602, %v1449, %v1451
        %1457 = vrot.lane.b32.xlu0 %v1308, 29
        %v1458 = vpop.permute.xlu0 %1457
        %1459 = vrot.lane.b32.xlu0 %v1304, 29
        %v1460 = vpop.permute.xlu0 %1459
        %1461 = vrot.lane.b32.xlu0 %v1309, 29
        %v1462 = vpop.permute.xlu0 %1461
        %vm1463 = vcmask 236544
        %v1464 = vsel %vm1463, %v1458, %v1460
        %v1465 = vsel %vm1463, %v1460, %v1462
        %1471 = vrot.lane.b32.xlu0 %v1389, 26
        %v1472 = vpop.permute.xlu0 %1471
        %1473 = vrot.lane.b32.xlu0 %v1390, 26
        %v1474 = vpop.permute.xlu0 %1473
        %1475 = vrot.lane.b32.xlu0 %v1391, 26
        %v1476 = vpop.permute.xlu0 %1475
        %vm1477 = vcmask 211968
        %v1478 = vsel %vm1477, %v1472, %v1474
        %v1479 = vsel %vm1477, %v1474, %v1476
        %v1482 = vld [vmem:[%s7] sm:$0xf]
        %vm1483 = vcmask 588800
        %v1485 = vsel %vm1483, %v1482, 0
        %1487 = vmatprep.subr.mxu0 0.0
        %1488 = vmatpush1.msra.mxu0 0.0
        %1489 = vmatprep.subr.mxu0 0.0
        %1490 = vmatpush1.msra.mxu0 0.0
        %1491 = vmatprep.subr.mxu0 0.0
        %1492 = vmatpush1.msra.mxu0 0.0
        %1493 = vmatprep.subr.mxu0 0.0
        %1494 = vmatpush1.msra.mxu0 0.0
        %1495 = vmatprep.subr.mxu0 0.0
        %1496 = vmatpush1.msra.mxu0 0.0
        %1497 = vmatprep.subr.mxu0 0.0
        %1498 = vmatpush1.msra.mxu0 0.0
        %1499 = vmatprep.subr.mxu0 0.0
        %1500 = vmatpush1.msra.mxu0 0.0
        %1501 = vmatprep.subr.mxu0 %v1479
        %1502 = vmatpush1.msra.mxu0 %v1478
        %1503 = vmatprep.subr.mxu0 %v1465
        %1504 = vmatpush1.msra.mxu0 %v1464
        %1505 = vmatprep.subr.mxu0 %v1453
        %1506 = vmatpush1.msra.mxu0 %v1452
        %1507 = vmatprep.subr.mxu0 %v1440
        %1508 = vmatpush1.msra.mxu0 %v1439
        %1509 = vmatprep.subr.mxu0 %v1424
        %1510 = vmatpush1.msra.mxu0 %v1426
        %1511 = vmatprep.subr.mxu0 %v1416
        %1512 = vmatpush1.msra.mxu0 %v1418
        %1513 = vmatprep.subr.mxu0 %v1406
        %1514 = vmatpush1.msra.mxu0 %v1408
        %1515 = vmatprep.subr.mxu0 %v1396
        %1516 = vmatpush1.msra.mxu0 %v1398
        %1517 = vmatprep.subr.mxu0 %v1327
        %1518 = vmatpush1.msra.mxu0 %v1326
        %1519 = vmatprep.subr.mxu0 0.0
        %1520 = vmatpush2.msra.mxu0 0.0
        %1521 = vmatprep.subr.mxu0 0.0
        %1522 = vmatpush2.msra.mxu0 0.0
        %1523 = vmatprep.subr.mxu0 0.0
        %1524 = vmatpush2.msra.mxu0 0.0
        %1525 = vmatprep.subr.mxu0 0.0
        %1526 = vmatpush2.msra.mxu0 0.0
        %1527 = vmatprep.subr.mxu0 0.0
        %1528 = vmatpush2.msra.mxu0 0.0
        %1529 = vmatprep.subr.mxu0 0.0
        %1530 = vmatpush2.msra.mxu0 0.0
        %1531 = vmatprep.subr.mxu0 0.0
        %1532 = vmatpush2.msra.mxu0 0.0
        %1533 = vmatprep.subr.mxu0 0.0
        %1534 = vmatpush2.msra.mxu0 0.0
        %1535 = vmatprep.subr.mxu0 0.0
        %1536 = vmatpush2.msra.mxu0 0.0
        %1537 = vmatprep.subr.mxu0 0.0
        %1538 = vmatpush2.msra.mxu0 0.0
        %1539 = vmatprep.subr.mxu0 0.0
        %1540 = vmatpush2.msra.mxu0 0.0
        %1541 = vmatprep.subr.mxu0 0.0
        %1542 = vmatpush2.msra.mxu0 0.0
        %1543 = vmatprep.subr.mxu0 0.0
        %1544 = vmatpush2.msra.mxu0 0.0
        %1545 = vmatprep.subr.mxu0 0.0
        %1546 = vmatpush2.msra.mxu0 0.0
        %1547 = vmatprep.subr.mxu0 0.0
        %1548 = vmatpush2.msra.mxu0 0.0
        %1549 = vmatprep.subr.mxu0 0.0
        %1550 = vmatpush2.msra.mxu0 0.0
        %1551 = vmatprep.mubr.f32.mxu0 0.0
        %1552 = vmatmul.mubr.f32.gmra.mxu0 %v1485
        %v1553 = vpop.f32.mrf.mxu0
        %v1554 = vadd.f32 0.0, %v1553
        %v1555 = vpop.f32.mrf.mxu0
        %v1556 = vadd.f32 0.0, %v1555
        %1557 = vdwg.mxu0
        %v1558 = vld [vmem:[%s10] sm:$0xf]
        %1560 = vset.pattern.permute.xlu0 0
        %1561 = vperm.xlu0 %1560, %v1558
        %v1562 = vpop.permute.xlu0 %1561
        %v1564 = vmul.f32 %v1554, %v1562
        %v1565 = vmul.f32 %v1556, %v1562
        %v1566 = vld [vmem:[%s11] sm:$0xf]
        %1568 = vset.pattern.permute.xlu0 0
        %1569 = vperm.xlu0 %1568, %v1566
        %v1570 = vpop.permute.xlu0 %1569
        %v1572 = vadd.f32 %v1564, %v1570
        %v1573 = vadd.f32 %v1565, %v1570
        %v1574 = vmax.f32 %v1572, 0.0
        %v1575 = vmax.f32 %v1573, 0.0
        %v1577 = vlaneseq
        %v1578 = vshrl.u32 %v1577, 7
        %v1579 = vsub.s32 0, %v1578
        %v1580 = vrot.slane %v1314, %v1579
        %v1581 = vlaneseq
        %v1582 = vshrl.u32 %v1581, 7
        %v1583 = vsub.s32 1, %v1582
        %v1584 = vrot.slane %v1314, %v1583
        %v1587 = vmul.f32 %v1574, %v1580
        %v1588 = vmul.f32 %v1575, %v1584
        %v1589 = vsel %vm728, %v1587, 0.0
        %vm1590 = vcmask 625664
        %v1591 = vsel %vm1590, %v1588, 0.0
        %v1592 = vadd.f32 %v1589, %v1591
        %1593 = vadd.xlane.f32.xlu0 %v1592
        %v1594 = vpop.xlane.xlu0 %1593
        %v1595 = vld [vmem:[%s12] sm:$0xf]
        %v1596 = vmul.f32 %v1595, %v1594
        %vm1597 = vcmask 11264
        %v1598 = vsel %vm1597, %v1596, 0.0
        %v1599 = vrot.slane %v1598, 4
        %v1600 = vadd.f32 %v1598, %v1599
        %v1601 = vrot.slane %v1600, 2
        %v1602 = vadd.f32 %v1600, %v1601
        %v1603 = vrot.slane %v1602, 1
        %v1604 = vadd.f32 %v1602, %v1603
        %v1605 = vld [vmem:[%s13] sm:$0x1]
        %v1606 = vadd.f32 %v1604, %v1605
        %vm1607 = vcmask 8192
        %v1608 = vsel %vm1607, %v1606, -inf
        %1609 = vmax.xlane.f32.xlu0 %v1608
        %v1610 = vpop.xlane.xlu0 %1609
        %v1611 = vsub.f32 %v1606, %v1610
        %v1612 = vmul.f32 %v1611, 1.442695
        %v1613 = vpow.pop %v1612
        %v1614 = vsel %vm1607, %v1613, 0.0
        %1615 = vadd.xlane.f32.xlu0 %v1614
        %v1616 = vpop.xlane.xlu0 %1615
        %v1617 = vrcp.pop %v1616
        %v1618 = vmul.f32 %v1613, %v1617
        %1619 = vst.msk [vmem:[%s535] sm:$0x1] %vm1607, %v1618
        %s1620 = sand.u32 %s345, 1
        %s1621 = scalar_lea.sflag [#allocation4], %s1620
        %s1622 = sand.u32 %s345, 1
        %s1623 = scalar_lea.vmem [#allocation10], %s1622
        // Predicated region
        $region93: #{tpu_custom_call.1} parent=75 // pred_check
          %p1624 = pneg %p355
        $region94: #{tpu_custom_call.1} parent=75 // pred_check_branch
          %1626 = sbr.rel (%p1624) target = $region96
        $region95: #{tpu_custom_call.1} parent=75 // pred_region
          %s1628 = ssub.s32 16, 16
          %1629 = vsyncadd %s1621, %s1628
          %s1630 = smul.addr %s33, 16
          %s1631 = scalar_lea.hbm %s14, %s1630
          %s1633 = sshll.u32 %s1623, 4
          %s1634 = int_to_ptr.vmem [resolvable:$true] %s1633
          %1636 = dma.vmem_to_hbm [thread:$0]  %s1634, 16, %s1631, %s1621
        $region96: #{tpu_custom_call.1} parent=75 // pred_fallthru
          _
      $region76: #{tpu_custom_call.1} parent=5 // pred_fallthru
        _
      %p1637 = scmp.le.s32.totalorder 2, %s28
      // Predicated region
      $region97: #{tpu_custom_call.1} parent=5 // pred_check
        %p1638 = pneg %p1637
      $region98: #{tpu_custom_call.1} parent=5 // pred_check_branch
        %1640 = sbr.rel (%p1638) target = $region100
      $region99: #{tpu_custom_call.1} parent=5 // pred_region
        %s1641 = ssub.s32 %s28, 2
        // Predicated region
        $region101: #{tpu_custom_call.1} parent=99 // pred_check
          %p1642 = pneg %p361
        $region102: #{tpu_custom_call.1} parent=99 // pred_check_branch
          %1644 = sbr.rel (%p1642) target = $region104
        $region103: #{tpu_custom_call.1} parent=99 // pred_region
          %s1645 = sand.u32 %s346, 1
          %s1646 = scalar_lea.sflag [#allocation4], %s1645
          %s1647 = sand.u32 %s346, 1
          %s1648 = scalar_lea.vmem [#allocation10], %s1647
          %1649 = dma.done %s1646, 16
        $region104: #{tpu_custom_call.1} parent=99 // pred_fallthru
          _
      $region100: #{tpu_custom_call.1} parent=5 // pred_fallthru
        _
    $region6: #{tpu_custom_call.1} parent=1 // loop_footer
      %s32 = sadd.s32 1, %s28
    $region7: #{tpu_custom_call.1} parent=1 // loop_footer_branch
      %27 = sbr.rel target = $region3
    $region8: #{tpu_custom_call.1} parent=1 // loop_exit
      _
    %1650 = vsyncpa [#allocation3], 1
    %s1651 = scalar_lea.sflag [#allocation3], 1
    %1652 = vsyncpa %s1651, 1
    %1653 = vsyncpa [#allocation6], 1
    %1654 = vsyncpa [#allocation9], 1
    %1655 = vsyncpa [#allocation4], 1
    %s1656 = scalar_lea.sflag [#allocation4], 1
    %1657 = vsyncpa %s1656, 1

</llo_original>
